<compile_context>
chip_gen: v7x
topology: tpu7x:2x2x1
jax: 0.10.0
libtpu: 0.0.40
codegen_flags: <defaults>
</compile_context>

<pallas_src>
import jax
import jax.numpy as jnp
import numpy as np
from jax.experimental import pallas as pl
from jax.experimental.pallas import tpu as pltpu

# Padded feature widths (weights are KB-scale, so padding is free and keeps
# every intermediate full-lane / full-vreg).
_HP = 128    # padded hidden width (columns of h)
_D1P = 128   # padded MLPReadout layer-1 width
_D2P = 128   # padded MLPReadout layer-2 width


def _round_up(x, m):
    return ((x + m - 1) // m) * m


def _pad2(a, rows, cols):
    return jnp.zeros((rows, cols), a.dtype).at[: a.shape[0], : a.shape[1]].set(a)


# ----------------------------------------------------------------------------
# Fused Pallas kernel: node embedding + edge gather + MLPReadout (transposed)
# ----------------------------------------------------------------------------
def _fused_edge_kernel(xT_ref, weT_ref, beT_ref, src_ref, dst_ref,
                       w1aT_ref, w1bT_ref, b1T_ref,
                       w2T_ref, b2T_ref, w3T_ref, b3T_ref, outT_ref):
    f32, bf16 = jnp.float32, jnp.bfloat16

    # --- node embedding (transposed): hT = We^T @ x^T + be^T ----------------
    # Recomputed per edge tile: it is tiny (HP x Kp x Np) next to the per-edge
    # work, and recomputation keeps the grid axis "parallel" (v7x megacore)
    # with no cross-iteration scratch dependency.
    hT = jnp.dot(weT_ref[...], xT_ref[...], preferred_element_type=f32)
    hT = (hT + beT_ref[...]).astype(bf16)                         # (HP, Np)
    n_pad = hT.shape[1]

    # --- in-kernel gather of h[src], h[dst] via one-hot matmul (MXU) --------
    src = src_ref[...]                                            # (1, T) int32
    dst = dst_ref[...]
    t = src.shape[1]
    node_ids = jax.lax.broadcasted_iota(jnp.int32, (n_pad, t), 0)
    oh_s = (node_ids == src).astype(f32).astype(bf16)             # (Np, T)
    oh_d = (node_ids == dst).astype(f32).astype(bf16)
    h_sT = jnp.dot(hT, oh_s, preferred_element_type=f32).astype(bf16)   # (HP, T)
    h_dT = jnp.dot(hT, oh_d, preferred_element_type=f32).astype(bf16)

    # --- MLPReadout (L=2): Linear -> ReLU -> Linear -> ReLU -> Linear -------
    # First Linear on the un-concatenated halves (W1 split at prep time).
    y = jnp.dot(w1aT_ref[...], h_sT, preferred_element_type=f32)
    y = y + jnp.dot(w1bT_ref[...], h_dT, preferred_element_type=f32)
    y = jnp.maximum(y + b1T_ref[...], 0.0).astype(bf16)           # (D1P, T)
    y = jnp.dot(w2T_ref[...], y, preferred_element_type=f32) + b2T_ref[...]
    y = jnp.maximum(y, 0.0).astype(bf16)                          # (D2P, T)
    y = jnp.dot(w3T_ref[...], y, preferred_element_type=f32) + b3T_ref[...]
    outT_ref[...] = y                                             # (CP, T) f32


# ----------------------------------------------------------------------------
# One-time parameter preprocessing (fuse / split / transpose / pad / cast)
# ----------------------------------------------------------------------------
def prepare_params(params):
    Wh, bh = params["Wh"], params["bh"]
    Wlap, blap = params["Wlap"], params["blap"]
    W1, b1 = params["W1"], params["b1"]
    W2, b2 = params["W2"], params["b2"]
    W3, b3 = params["W3"], params["b3"]

    k_in = Wh.shape[0] + Wlap.shape[0]
    kp = _round_up(k_in, 16)              # bf16 sublane packing
    h_dim = W1.shape[0] // 2              # width of h feeding the MLPReadout
    cp = _round_up(W3.shape[1], 8)        # sublane-aligned transposed logits

    # embedding_h + embedding_lap fused along K:
    #   h = [h_in | lap] @ [Wh ; Wlap] + (bh + blap)
    WcatT = jnp.concatenate([Wh, Wlap], axis=0).T                 # (H, K)
    return {
        "WeT":  _pad2(WcatT, _HP, kp).astype(jnp.bfloat16),        # (HP, Kp)
        "beT":  _pad2((bh + blap).T, _HP, 1),                      # (HP, 1) f32
        # W1 split so concat(h_src, h_dst) is never materialized.
        "W1aT": _pad2(W1[:h_dim].T, _D1P, _HP).astype(jnp.bfloat16),
        "W1bT": _pad2(W1[h_dim:].T, _D1P, _HP).astype(jnp.bfloat16),
        "b1T":  _pad2(b1.T, _D1P, 1),
        "W2T":  _pad2(W2.T, _D2P, _D1P).astype(jnp.bfloat16),
        "b2T":  _pad2(b2.T, _D2P, 1),
        "W3T":  _pad2(W3.T, cp, _D2P).astype(jnp.bfloat16),
        "b3T":  _pad2(b3.T, cp, 1),
    }


# ----------------------------------------------------------------------------
# LiteGTNet forward (graph_kernel='default', jaccard_sparse=False,
# dim_reduce=False, edge_feat=True, lap_pos_enc=True)
# ----------------------------------------------------------------------------
def litegt_forward(prep, src, dst, h_in, e_in, lap_in, *, n_classes, tile=1024):
    # TODO(synk): LiteGTLayer stack treated as identity (no source provided);
    # embedding_e / initialize_edge_score are dead w.r.t. the returned logits.
    del e_in

    n_nodes = h_in.shape[0]
    n_edges = src.shape[0]
    kp = prep["WeT"].shape[1]
    cp = prep["W3T"].shape[0]

    # --- tiny per-step input prep (fused by XLA under jit) ------------------
    np_pad = _round_up(n_nodes, 128)
    x = jnp.concatenate([h_in, lap_in], axis=1)                   # (N, K)
    xT = jnp.zeros((kp, np_pad), jnp.bfloat16)
    xT = xT.at[: x.shape[1], :n_nodes].set(x.T.astype(jnp.bfloat16))

    tile = max(128, min(tile, _round_up(n_edges, 128)))
    e_pad = _round_up(n_edges, tile)
    srcT = jnp.zeros((1, e_pad), jnp.int32).at[0, :n_edges].set(src)
    dstT = jnp.zeros((1, e_pad), jnp.int32).at[0, :n_edges].set(dst)

    const = lambda i: (0, 0)
    edge_blk = lambda i: (0, i)

    outT = pl.pallas_call(
        _fused_edge_kernel,
        out_shape=jax.ShapeDtypeStruct((cp, e_pad), jnp.float32),
        grid=(e_pad // tile,),
        in_specs=[
            pl.BlockSpec((kp, np_pad), const),      # xT       (node inputs)
            pl.BlockSpec((_HP, kp), const),         # WeT
            pl.BlockSpec((_HP, 1), const),          # beT
            pl.BlockSpec((1, tile), edge_blk),      # src indices
            pl.BlockSpec((1, tile), edge_blk),      # dst indices
            pl.BlockSpec((_D1P, _HP), const),       # W1aT
            pl.BlockSpec((_D1P, _HP), const),       # W1bT
            pl.BlockSpec((_D1P, 1), const),         # b1T
            pl.BlockSpec((_D2P, _D1P), const),      # W2T
            pl.BlockSpec((_D2P, 1), const),         # b2T
            pl.BlockSpec((cp, _D2P), const),        # W3T
            pl.BlockSpec((cp, 1), const),           # b3T
        ],
        out_specs=pl.BlockSpec((cp, tile), edge_blk),
        compiler_params=pltpu.CompilerParams(
            dimension_semantics=("parallel",),
            vmem_limit_bytes=32 * 1024 * 1024,      # v5e scoped default is 16 MiB
        ),
    )(xT, prep["WeT"], prep["beT"], srcT, dstT,
      prep["W1aT"], prep["W1bT"], prep["b1T"],
      prep["W2T"], prep["b2T"], prep["W3T"], prep["b3T"])

    # Slice real classes / real edges; return edge-major logits.
    return outT[:n_classes, :n_edges].T


litegt_forward_jit = jax.jit(litegt_forward, static_argnames=("n_classes", "tile"))


# ----------------------------------------------------------------------------
# Pure-JAX reference with matching bf16 quantization points (sanity check)
# ----------------------------------------------------------------------------
def _reference_bf16(params, src, dst, h_in, lap_in):
    bf16, f32 = jnp.bfloat16, jnp.float32
    x = jnp.concatenate([h_in, lap_in], axis=1).astype(bf16)
    Wcat = jnp.concatenate([params["Wh"], params["Wlap"]], axis=0).astype(bf16)
    h = jnp.dot(x, Wcat, preferred_element_type=f32) + (params["bh"] + params["blap"])
    h = h.astype(bf16)
    feat = jnp.concatenate([h[src], h[dst]], axis=1)
    y = jnp.dot(feat, params["W1"].astype(bf16), preferred_element_type=f32) + params["b1"]
    y = jnp.maximum(y, 0.0).astype(bf16)
    y = jnp.dot(y, params["W2"].astype(bf16), preferred_element_type=f32) + params["b2"]
    y = jnp.maximum(y, 0.0).astype(bf16)
    y = jnp.dot(y, params["W3"].astype(bf16), preferred_element_type=f32) + params["b3"]
    return y


# ----------------------------------------------------------------------------
# Main
# ----------------------------------------------------------------------------
if __name__ == "__main__":
    # net_params (small)
    in_dim, in_dim_edge, pos_enc_dim = 8, 4, 4
    hidden_dim, out_dim = 32, 32
    num_heads, n_classes = 4, 2
    N, E = 16, 64

    key = jax.random.PRNGKey(0)
    keys = jax.random.split(key, 16)

    # Deterministic synthetic graph: ring (in-degree >= 1) + random edges.
    ring_src = jnp.arange(N, dtype=jnp.int32)
    ring_dst = (jnp.arange(N, dtype=jnp.int32) + 1) % N
    rand_src = jax.random.randint(keys[0], (E - N,), 0, N, dtype=jnp.int32)
    rand_dst = jax.random.randint(keys[1], (E - N,), 0, N, dtype=jnp.int32)
    src = jnp.concatenate([ring_src, rand_src])
    dst = jnp.concatenate([ring_dst, rand_dst])

    # Inputs
    h_in = jax.random.normal(keys[2], (N, in_dim), jnp.float32)
    e_in = jax.random.normal(keys[3], (E, in_dim_edge), jnp.float32)
    lap_in = jax.random.normal(keys[4], (N, pos_enc_dim), jnp.float32)

    # Deterministic parameters (shapes from LiteGTNet.__init__)
    def init_w(k, shape):
        return jax.random.normal(k, shape, jnp.float32) * 0.1

    params = {
        "Wh": init_w(keys[5], (in_dim, hidden_dim)),
        "bh": init_w(keys[6], (1, hidden_dim)),
        "Wlap": init_w(keys[7], (pos_enc_dim, hidden_dim)),
        "blap": init_w(keys[8], (1, hidden_dim)),
        # graph_kernel != 'jaccard' -> embedding_e: in_dim_edge -> hidden_dim
        # (unused while the LiteGTLayer stack is identity; kept for shape parity)
        "We": init_w(keys[9], (in_dim_edge, hidden_dim)),
        "be": init_w(keys[10], (1, hidden_dim)),
        # MLPReadout(2*out_dim, n_classes), L=2: 64 -> 32 -> 16 -> 2
        "W1": init_w(keys[11], (2 * out_dim, (2 * out_dim) // 2)),
        "b1": init_w(keys[12], (1, (2 * out_dim) // 2)),
        "W2": init_w(keys[13], ((2 * out_dim) // 2, (2 * out_dim) // 4)),
        "b2": init_w(keys[14], (1, (2 * out_dim) // 4)),
        "W3": init_w(keys[15], ((2 * out_dim) // 4, n_classes)),
        "b3": jnp.zeros((1, n_classes), jnp.float32),
    }

    # One-time parameter preprocessing (hoisted out of the forward).
    prep = prepare_params(params)

    logits = litegt_forward_jit(prep, src, dst, h_in, e_in, lap_in,
                                n_classes=n_classes, tile=1024)
    logits = jax.block_until_ready(logits)
    assert logits.shape == (E, n_classes) and logits.dtype == jnp.float32
    assert bool(jnp.all(jnp.isfinite(logits)))

    ref = _reference_bf16(params, src, dst, h_in, lap_in)
    np.testing.assert_allclose(np.asarray(logits), np.asarray(ref),
                               rtol=1e-2, atol=1e-2)
    print("KERNEL_OK")
</pallas_src>

<mosaic_0001>
module attributes {stable_mosaic.version = 11 : i64} {
  func.func @_fused_edge_kernel(%arg0: i32, %arg1: memref<16x128xbf16, #tpu.memory_space<vmem>>, %arg2: memref<128x16xbf16, #tpu.memory_space<vmem>>, %arg3: memref<128x1xf32, #tpu.memory_space<vmem>>, %arg4: memref<1x128xi32, #tpu.memory_space<vmem>>, %arg5: memref<1x128xi32, #tpu.memory_space<vmem>>, %arg6: memref<128x128xbf16, #tpu.memory_space<vmem>>, %arg7: memref<128x128xbf16, #tpu.memory_space<vmem>>, %arg8: memref<128x1xf32, #tpu.memory_space<vmem>>, %arg9: memref<128x128xbf16, #tpu.memory_space<vmem>>, %arg10: memref<128x1xf32, #tpu.memory_space<vmem>>, %arg11: memref<8x128xbf16, #tpu.memory_space<vmem>>, %arg12: memref<8x1xf32, #tpu.memory_space<vmem>>, %arg13: memref<8x128xf32, #tpu.memory_space<vmem>>) attributes {dimension_semantics = [#tpu.dimension_semantics<parallel>], iteration_bounds = array<i64: 1>, scalar_prefetch = 0 : i64, scratch_operands = 0 : i64, tpu.core_type = #tpu.core_type<tc>, window_params = [{pipeline_mode = #tpu.pipeline_mode<synchronous>, transform_indices = @transform_0, window_bounds = array<i64: 16, 128>}, {pipeline_mode = #tpu.pipeline_mode<synchronous>, transform_indices = @transform_1, window_bounds = array<i64: 128, 16>}, {pipeline_mode = #tpu.pipeline_mode<synchronous>, transform_indices = @transform_2, window_bounds = array<i64: 128, 1>}, {transform_indices = @transform_3, window_bounds = array<i64: 1, 128>}, {transform_indices = @transform_4, window_bounds = array<i64: 1, 128>}, {pipeline_mode = #tpu.pipeline_mode<synchronous>, transform_indices = @transform_5, window_bounds = array<i64: 128, 128>}, {pipeline_mode = #tpu.pipeline_mode<synchronous>, transform_indices = @transform_6, window_bounds = array<i64: 128, 128>}, {pipeline_mode = #tpu.pipeline_mode<synchronous>, transform_indices = @transform_7, window_bounds = array<i64: 128, 1>}, {pipeline_mode = #tpu.pipeline_mode<synchronous>, transform_indices = @transform_8, window_bounds = array<i64: 128, 128>}, {pipeline_mode = #tpu.pipeline_mode<synchronous>, transform_indices = @transform_9, window_bounds = array<i64: 128, 1>}, {pipeline_mode = #tpu.pipeline_mode<synchronous>, transform_indices = @transform_10, window_bounds = array<i64: 8, 128>}, {pipeline_mode = #tpu.pipeline_mode<synchronous>, transform_indices = @transform_11, window_bounds = array<i64: 8, 1>}, {transform_indices = @transform_12, window_bounds = array<i64: 8, 128>}]} {
    %c0 = arith.constant 0 : index
    %c0_0 = arith.constant 0 : index
    %0 = vector.load %arg2[%c0, %c0_0] : memref<128x16xbf16, #tpu.memory_space<vmem>>, vector<128x16xbf16>
    %c0_1 = arith.constant 0 : index
    %c0_2 = arith.constant 0 : index
    %1 = vector.load %arg1[%c0_1, %c0_2] : memref<16x128xbf16, #tpu.memory_space<vmem>>, vector<16x128xbf16>
    %cst = arith.constant dense<0.000000e+00> : vector<128x128xf32>
    %2 = tpu.matmul %0, %1, %cst {dimension_numbers = #tpu.dot_dimension_numbers<[1], [0], [0], [1], [0, 0, 1, 1], [], []>} : vector<128x16xbf16>, vector<16x128xbf16>, vector<128x128xf32> -> vector<128x128xf32>
    %c0_3 = arith.constant 0 : index
    %c0_4 = arith.constant 0 : index
    %3 = vector.load %arg3[%c0_3, %c0_4] : memref<128x1xf32, #tpu.memory_space<vmem>>, vector<128x1xf32>
    %4 = vector.broadcast %3 : vector<128x1xf32> to vector<128x128xf32>
    %5 = arith.addf %2, %4 : vector<128x128xf32>
    %6 = arith.truncf %5 : vector<128x128xf32> to vector<128x128xbf16>
    %c0_5 = arith.constant 0 : index
    %c0_6 = arith.constant 0 : index
    %7 = vector.load %arg4[%c0_5, %c0_6] : memref<1x128xi32, #tpu.memory_space<vmem>>, vector<1x128xi32>
    %c0_7 = arith.constant 0 : index
    %c0_8 = arith.constant 0 : index
    %8 = vector.load %arg5[%c0_7, %c0_8] : memref<1x128xi32, #tpu.memory_space<vmem>>, vector<1x128xi32>
    %9 = tpu.iota {dimensions = array<i32: 0>} : vector<128x128xi32>
    %10 = vector.broadcast %7 : vector<1x128xi32> to vector<128x128xi32>
    %11 = arith.cmpi eq, %9, %10 : vector<128x128xi32>
    %12 = arith.extui %11 : vector<128x128xi1> to vector<128x128xi32>
    %13 = arith.sitofp %12 : vector<128x128xi32> to vector<128x128xf32>
    %14 = arith.truncf %13 : vector<128x128xf32> to vector<128x128xbf16>
    %15 = vector.broadcast %8 : vector<1x128xi32> to vector<128x128xi32>
    %16 = arith.cmpi eq, %9, %15 : vector<128x128xi32>
    %17 = arith.extui %16 : vector<128x128xi1> to vector<128x128xi32>
    %18 = arith.sitofp %17 : vector<128x128xi32> to vector<128x128xf32>
    %19 = arith.truncf %18 : vector<128x128xf32> to vector<128x128xbf16>
    %cst_9 = arith.constant dense<0.000000e+00> : vector<128x128xf32>
    %20 = tpu.matmul %6, %14, %cst_9 {dimension_numbers = #tpu.dot_dimension_numbers<[1], [0], [0], [1], [0, 0, 1, 1], [], []>} : vector<128x128xbf16>, vector<128x128xbf16>, vector<128x128xf32> -> vector<128x128xf32>
    %21 = arith.truncf %20 : vector<128x128xf32> to vector<128x128xbf16>
    %cst_10 = arith.constant dense<0.000000e+00> : vector<128x128xf32>
    %22 = tpu.matmul %6, %19, %cst_10 {dimension_numbers = #tpu.dot_dimension_numbers<[1], [0], [0], [1], [0, 0, 1, 1], [], []>} : vector<128x128xbf16>, vector<128x128xbf16>, vector<128x128xf32> -> vector<128x128xf32>
    %23 = arith.truncf %22 : vector<128x128xf32> to vector<128x128xbf16>
    %c0_11 = arith.constant 0 : index
    %c0_12 = arith.constant 0 : index
    %24 = vector.load %arg6[%c0_11, %c0_12] : memref<128x128xbf16, #tpu.memory_space<vmem>>, vector<128x128xbf16>
    %cst_13 = arith.constant dense<0.000000e+00> : vector<128x128xf32>
    %25 = tpu.matmul %24, %21, %cst_13 {dimension_numbers = #tpu.dot_dimension_numbers<[1], [0], [0], [1], [0, 0, 1, 1], [], []>} : vector<128x128xbf16>, vector<128x128xbf16>, vector<128x128xf32> -> vector<128x128xf32>
    %c0_14 = arith.constant 0 : index
    %c0_15 = arith.constant 0 : index
    %26 = vector.load %arg7[%c0_14, %c0_15] : memref<128x128xbf16, #tpu.memory_space<vmem>>, vector<128x128xbf16>
    %cst_16 = arith.constant dense<0.000000e+00> : vector<128x128xf32>
    %27 = tpu.matmul %26, %23, %cst_16 {dimension_numbers = #tpu.dot_dimension_numbers<[1], [0], [0], [1], [0, 0, 1, 1], [], []>} : vector<128x128xbf16>, vector<128x128xbf16>, vector<128x128xf32> -> vector<128x128xf32>
    %28 = arith.addf %25, %27 : vector<128x128xf32>
    %c0_17 = arith.constant 0 : index
    %c0_18 = arith.constant 0 : index
    %29 = vector.load %arg8[%c0_17, %c0_18] : memref<128x1xf32, #tpu.memory_space<vmem>>, vector<128x1xf32>
    %30 = vector.broadcast %29 : vector<128x1xf32> to vector<128x128xf32>
    %31 = arith.addf %28, %30 : vector<128x128xf32>
    %cst_19 = arith.constant 0.000000e+00 : f32
    %32 = vector.broadcast %cst_19 : f32 to vector<128x128xf32>
    %33 = arith.maximumf %31, %32 : vector<128x128xf32>
    %34 = arith.truncf %33 : vector<128x128xf32> to vector<128x128xbf16>
    %c0_20 = arith.constant 0 : index
    %c0_21 = arith.constant 0 : index
    %35 = vector.load %arg9[%c0_20, %c0_21] : memref<128x128xbf16, #tpu.memory_space<vmem>>, vector<128x128xbf16>
    %cst_22 = arith.constant dense<0.000000e+00> : vector<128x128xf32>
    %36 = tpu.matmul %35, %34, %cst_22 {dimension_numbers = #tpu.dot_dimension_numbers<[1], [0], [0], [1], [0, 0, 1, 1], [], []>} : vector<128x128xbf16>, vector<128x128xbf16>, vector<128x128xf32> -> vector<128x128xf32>
    %c0_23 = arith.constant 0 : index
    %c0_24 = arith.constant 0 : index
    %37 = vector.load %arg10[%c0_23, %c0_24] : memref<128x1xf32, #tpu.memory_space<vmem>>, vector<128x1xf32>
    %38 = vector.broadcast %37 : vector<128x1xf32> to vector<128x128xf32>
    %39 = arith.addf %36, %38 : vector<128x128xf32>
    %cst_25 = arith.constant 0.000000e+00 : f32
    %40 = vector.broadcast %cst_25 : f32 to vector<128x128xf32>
    %41 = arith.maximumf %39, %40 : vector<128x128xf32>
    %42 = arith.truncf %41 : vector<128x128xf32> to vector<128x128xbf16>
    %c0_26 = arith.constant 0 : index
    %c0_27 = arith.constant 0 : index
    %43 = vector.load %arg11[%c0_26, %c0_27] : memref<8x128xbf16, #tpu.memory_space<vmem>>, vector<8x128xbf16>
    %cst_28 = arith.constant dense<0.000000e+00> : vector<8x128xf32>
    %44 = tpu.matmul %43, %42, %cst_28 {dimension_numbers = #tpu.dot_dimension_numbers<[1], [0], [0], [1], [0, 0, 1, 1], [], []>} : vector<8x128xbf16>, vector<128x128xbf16>, vector<8x128xf32> -> vector<8x128xf32>
    %c0_29 = arith.constant 0 : index
    %c0_30 = arith.constant 0 : index
    %45 = vector.load %arg12[%c0_29, %c0_30] : memref<8x1xf32, #tpu.memory_space<vmem>>, vector<8x1xf32>
    %46 = vector.broadcast %45 : vector<8x1xf32> to vector<8x128xf32>
    %47 = arith.addf %44, %46 : vector<8x128xf32>
    %c0_31 = arith.constant 0 : index
    %c0_32 = arith.constant 0 : index
    %48 = vector.load %arg13[%c0_31, %c0_32] : memref<8x128xf32, #tpu.memory_space<vmem>>, vector<8x128xf32>
    tpu.vector_store %arg13[%c0_31, %c0_32], %47 {strides = array<i32>} : memref<8x128xf32, #tpu.memory_space<vmem>>, vector<8x128xf32>,
    return
  }
  func.func @transform_0(%arg0: i32) -> (i32, i32) {
    %c0_i32 = arith.constant 0 : i32
    %c0_i32_0 = arith.constant 0 : i32
    %c0_i32_1 = arith.constant 0 : i32
    return %c0_i32, %c0_i32_0 : i32, i32
  }
  func.func @transform_1(%arg0: i32) -> (i32, i32) {
    %c0_i32 = arith.constant 0 : i32
    %c0_i32_0 = arith.constant 0 : i32
    %c0_i32_1 = arith.constant 0 : i32
    return %c0_i32, %c0_i32_0 : i32, i32
  }
  func.func @transform_2(%arg0: i32) -> (i32, i32) {
    %c0_i32 = arith.constant 0 : i32
    %c0_i32_0 = arith.constant 0 : i32
    %c0_i32_1 = arith.constant 0 : i32
    return %c0_i32, %c0_i32_0 : i32, i32
  }
  func.func @transform_3(%arg0: i32) -> (i32, i32) {
    %c0_i32 = arith.constant 0 : i32
    %c0_i32_0 = arith.constant 0 : i32
    return %c0_i32, %arg0 : i32, i32
  }
  func.func @transform_4(%arg0: i32) -> (i32, i32) {
    %c0_i32 = arith.constant 0 : i32
    %c0_i32_0 = arith.constant 0 : i32
    return %c0_i32, %arg0 : i32, i32
  }
  func.func @transform_5(%arg0: i32) -> (i32, i32) {
    %c0_i32 = arith.constant 0 : i32
    %c0_i32_0 = arith.constant 0 : i32
    %c0_i32_1 = arith.constant 0 : i32
    return %c0_i32, %c0_i32_0 : i32, i32
  }
  func.func @transform_6(%arg0: i32) -> (i32, i32) {
    %c0_i32 = arith.constant 0 : i32
    %c0_i32_0 = arith.constant 0 : i32
    %c0_i32_1 = arith.constant 0 : i32
    return %c0_i32, %c0_i32_0 : i32, i32
  }
  func.func @transform_7(%arg0: i32) -> (i32, i32) {
    %c0_i32 = arith.constant 0 : i32
    %c0_i32_0 = arith.constant 0 : i32
    %c0_i32_1 = arith.constant 0 : i32
    return %c0_i32, %c0_i32_0 : i32, i32
  }
  func.func @transform_8(%arg0: i32) -> (i32, i32) {
    %c0_i32 = arith.constant 0 : i32
    %c0_i32_0 = arith.constant 0 : i32
    %c0_i32_1 = arith.constant 0 : i32
    return %c0_i32, %c0_i32_0 : i32, i32
  }
  func.func @transform_9(%arg0: i32) -> (i32, i32) {
    %c0_i32 = arith.constant 0 : i32
    %c0_i32_0 = arith.constant 0 : i32
    %c0_i32_1 = arith.constant 0 : i32
    return %c0_i32, %c0_i32_0 : i32, i32
  }
  func.func @transform_10(%arg0: i32) -> (i32, i32) {
    %c0_i32 = arith.constant 0 : i32
    %c0_i32_0 = arith.constant 0 : i32
    %c0_i32_1 = arith.constant 0 : i32
    return %c0_i32, %c0_i32_0 : i32, i32
  }
  func.func @transform_11(%arg0: i32) -> (i32, i32) {
    %c0_i32 = arith.constant 0 : i32
    %c0_i32_0 = arith.constant 0 : i32
    %c0_i32_1 = arith.constant 0 : i32
    return %c0_i32, %c0_i32_0 : i32, i32
  }
  func.func @transform_12(%arg0: i32) -> (i32, i32) {
    %c0_i32 = arith.constant 0 : i32
    %c0_i32_0 = arith.constant 0 : i32
    return %c0_i32, %arg0 : i32, i32
  }
}

</mosaic_0001>

<llo_original>
// kernel: litegt_forward.1
$region0: #{litegt_forward.1}
  #allocation0 [shape = 'u32[]', space=smem, size = 0x4, offset = 0x4, fixed_abs, tag = 'smem constant byte address 0x4 - core index']
  #allocation1 [shape = 'u32[144,128]{1,0:T(1,128)}', space=vmem, size = 0x12000, scoped, tag = 'internal scratch']
  %s0 = inlined_call_operand.vmem [shape: bf16[16,128], index: 0, kind: input, shape index: {}]
  %s1 = inlined_call_operand.vmem [shape: bf16[128,16], index: 1, kind: input, shape index: {}]
  %s2 = inlined_call_operand.vmem [shape: f32[128,1], index: 2, kind: input, shape index: {}]
  %s3 = inlined_call_operand.vmem [shape: s32[1,128], index: 3, kind: input, shape index: {}]
  %s4 = inlined_call_operand.vmem [shape: s32[1,128], index: 4, kind: input, shape index: {}]
  %s5 = inlined_call_operand.vmem [shape: bf16[128,128], index: 5, kind: input, shape index: {}]
  %s6 = inlined_call_operand.vmem [shape: bf16[128,128], index: 6, kind: input, shape index: {}]
  %s7 = inlined_call_operand.vmem [shape: f32[128,1], index: 7, kind: input, shape index: {}]
  %s8 = inlined_call_operand.vmem [shape: bf16[128,128], index: 8, kind: input, shape index: {}]
  %s9 = inlined_call_operand.vmem [shape: f32[128,1], index: 9, kind: input, shape index: {}]
  %s10 = inlined_call_operand.vmem [shape: bf16[8,128], index: 10, kind: input, shape index: {}]
  %s11 = inlined_call_operand.vmem [shape: f32[8,1], index: 11, kind: input, shape index: {}]
  %s12 = inlined_call_operand.vmem [shape: f32[8,128], index: 12, kind: output, shape index: {}]
  %s13 = sld [smem:[#allocation0]]
  $region58: #{litegt_forward.1} parent=0
    _
  %s15 = ssub.s32 1, %s13
  %s16 = scalar_select 0, %s15, %s13
  // Predicated region
  $region2: #{litegt_forward.1} parent=0 // pred_check
    _
  $region3: #{litegt_forward.1} parent=0 // pred_check_branch
    %18 = sbr.rel (0) target = $region5
  $region4: #{litegt_forward.1} parent=0 // pred_region
    _
  $region5: #{litegt_forward.1} parent=0 // pred_fallthru
    _
  // Predicated region
  $region6: #{litegt_forward.1} parent=0 // pred_check
    _
  $region7: #{litegt_forward.1} parent=0 // pred_check_branch
    %20 = sbr.rel (0) target = $region9
  $region8: #{litegt_forward.1} parent=0 // pred_region
    _
  $region9: #{litegt_forward.1} parent=0 // pred_fallthru
    _
  // Predicated region
  $region10: #{litegt_forward.1} parent=0 // pred_check
    _
  $region11: #{litegt_forward.1} parent=0 // pred_check_branch
    %22 = sbr.rel (0) target = $region13
  $region12: #{litegt_forward.1} parent=0 // pred_region
    _
  $region13: #{litegt_forward.1} parent=0 // pred_fallthru
    _
  // Predicated region
  $region14: #{litegt_forward.1} parent=0 // pred_check
    _
  $region15: #{litegt_forward.1} parent=0 // pred_check_branch
    %24 = sbr.rel (0) target = $region17
  $region16: #{litegt_forward.1} parent=0 // pred_region
    _
  $region17: #{litegt_forward.1} parent=0 // pred_fallthru
    _
  // Predicated region
  $region18: #{litegt_forward.1} parent=0 // pred_check
    _
  $region19: #{litegt_forward.1} parent=0 // pred_check_branch
    %26 = sbr.rel (0) target = $region21
  $region20: #{litegt_forward.1} parent=0 // pred_region
    _
  $region21: #{litegt_forward.1} parent=0 // pred_fallthru
    _
  // Predicated region
  $region22: #{litegt_forward.1} parent=0 // pred_check
    _
  $region23: #{litegt_forward.1} parent=0 // pred_check_branch
    %28 = sbr.rel (0) target = $region25
  $region24: #{litegt_forward.1} parent=0 // pred_region
    _
  $region25: #{litegt_forward.1} parent=0 // pred_fallthru
    _
  // Predicated region
  $region26: #{litegt_forward.1} parent=0 // pred_check
    _
  $region27: #{litegt_forward.1} parent=0 // pred_check_branch
    %30 = sbr.rel (0) target = $region29
  $region28: #{litegt_forward.1} parent=0 // pred_region
    _
  $region29: #{litegt_forward.1} parent=0 // pred_fallthru
    _
  // Predicated region
  $region30: #{litegt_forward.1} parent=0 // pred_check
    _
  $region31: #{litegt_forward.1} parent=0 // pred_check_branch
    %32 = sbr.rel (0) target = $region33
  $region32: #{litegt_forward.1} parent=0 // pred_region
    _
  $region33: #{litegt_forward.1} parent=0 // pred_fallthru
    _
  // Predicated region
  $region34: #{litegt_forward.1} parent=0 // pred_check
    _
  $region35: #{litegt_forward.1} parent=0 // pred_check_branch
    %34 = sbr.rel (0) target = $region37
  $region36: #{litegt_forward.1} parent=0 // pred_region
    _
  $region37: #{litegt_forward.1} parent=0 // pred_fallthru
    _
  // Predicated region
  $region38: #{litegt_forward.1} parent=0 // pred_check
    _
  $region39: #{litegt_forward.1} parent=0 // pred_check_branch
    %36 = sbr.rel (0) target = $region41
  $region40: #{litegt_forward.1} parent=0 // pred_region
    _
  $region41: #{litegt_forward.1} parent=0 // pred_fallthru
    _
  // Predicated region
  $region42: #{litegt_forward.1} parent=0 // pred_check
    _
  $region43: #{litegt_forward.1} parent=0 // pred_check_branch
    %38 = sbr.rel (0) target = $region45
  $region44: #{litegt_forward.1} parent=0 // pred_region
    _
  $region45: #{litegt_forward.1} parent=0 // pred_fallthru
    _
  // Predicated region
  $region46: #{litegt_forward.1} parent=0 // pred_check
    _
  $region47: #{litegt_forward.1} parent=0 // pred_check_branch
    %40 = sbr.rel (0) target = $region49
  $region48: #{litegt_forward.1} parent=0 // pred_region
    _
  $region49: #{litegt_forward.1} parent=0 // pred_fallthru
    _
  %v42 = vld [vmem:[%s1] sm:$0xf]
  %v43 = vld [vmem:[%s1 + $0x4] sm:$0xf]
  %v44 = vld [vmem:[%s1 + $0x8] sm:$0xf]
  %v45 = vld [vmem:[%s1 + $0xc] sm:$0xf]
  %v46 = vld [vmem:[%s1 + $0x10] sm:$0xf]
  %v47 = vld [vmem:[%s1 + $0x14] sm:$0xf]
  %v48 = vld [vmem:[%s1 + $0x18] sm:$0xf]
  %v49 = vld [vmem:[%s1 + $0x1c] sm:$0xf]
  %v50 = vld [vmem:[%s1 + $0x20] sm:$0xf]
  %v51 = vld [vmem:[%s1 + $0x24] sm:$0xf]
  %v52 = vld [vmem:[%s1 + $0x28] sm:$0xf]
  %v53 = vld [vmem:[%s1 + $0x2c] sm:$0xf]
  %v54 = vld [vmem:[%s1 + $0x30] sm:$0xf]
  %v55 = vld [vmem:[%s1 + $0x34] sm:$0xf]
  %v56 = vld [vmem:[%s1 + $0x38] sm:$0xf]
  %v57 = vld [vmem:[%s1 + $0x3c] sm:$0xf]
  %v58 = vld [vmem:[%s0] sm:$0xf]
  %v59 = vld [vmem:[%s0 + $0x4] sm:$0xf]
  %v60 = vld [vmem:[%s2] sm:$0xff]
  %v61 = vld [vmem:[%s2 + $0x8] sm:$0xff]
  %v62 = vld [vmem:[%s2 + $0x10] sm:$0xff]
  %v63 = vld [vmem:[%s2 + $0x18] sm:$0xff]
  %v64 = vld [vmem:[%s2 + $0x20] sm:$0xff]
  %v65 = vld [vmem:[%s2 + $0x28] sm:$0xff]
  %v66 = vld [vmem:[%s2 + $0x30] sm:$0xff]
  %v67 = vld [vmem:[%s2 + $0x38] sm:$0xff]
  %v68 = vld [vmem:[%s2 + $0x40] sm:$0xff]
  %v69 = vld [vmem:[%s2 + $0x48] sm:$0xff]
  %v70 = vld [vmem:[%s2 + $0x50] sm:$0xff]
  %v71 = vld [vmem:[%s2 + $0x58] sm:$0xff]
  %v72 = vld [vmem:[%s2 + $0x60] sm:$0xff]
  %v73 = vld [vmem:[%s2 + $0x68] sm:$0xff]
  %v74 = vld [vmem:[%s2 + $0x70] sm:$0xff]
  %v75 = vld [vmem:[%s2 + $0x78] sm:$0xff]
  %77 = vset.pattern.permute.xlu0 0
  %78 = vperm.xlu0 %77, %v60
  %v79 = vpop.permute.xlu0 %78
  %82 = vset.pattern.permute.xlu0 0
  %83 = vperm.xlu0 %82, %v61
  %v84 = vpop.permute.xlu0 %83
  %87 = vset.pattern.permute.xlu0 0
  %88 = vperm.xlu0 %87, %v62
  %v89 = vpop.permute.xlu0 %88
  %92 = vset.pattern.permute.xlu0 0
  %93 = vperm.xlu0 %92, %v63
  %v94 = vpop.permute.xlu0 %93
  %97 = vset.pattern.permute.xlu0 0
  %98 = vperm.xlu0 %97, %v64
  %v99 = vpop.permute.xlu0 %98
  %102 = vset.pattern.permute.xlu0 0
  %103 = vperm.xlu0 %102, %v65
  %v104 = vpop.permute.xlu0 %103
  %107 = vset.pattern.permute.xlu0 0
  %108 = vperm.xlu0 %107, %v66
  %v109 = vpop.permute.xlu0 %108
  %112 = vset.pattern.permute.xlu0 0
  %113 = vperm.xlu0 %112, %v67
  %v114 = vpop.permute.xlu0 %113
  %117 = vset.pattern.permute.xlu0 0
  %118 = vperm.xlu0 %117, %v68
  %v119 = vpop.permute.xlu0 %118
  %122 = vset.pattern.permute.xlu0 0
  %123 = vperm.xlu0 %122, %v69
  %v124 = vpop.permute.xlu0 %123
  %127 = vset.pattern.permute.xlu0 0
  %128 = vperm.xlu0 %127, %v70
  %v129 = vpop.permute.xlu0 %128
  %132 = vset.pattern.permute.xlu0 0
  %133 = vperm.xlu0 %132, %v71
  %v134 = vpop.permute.xlu0 %133
  %137 = vset.pattern.permute.xlu0 0
  %138 = vperm.xlu0 %137, %v72
  %v139 = vpop.permute.xlu0 %138
  %142 = vset.pattern.permute.xlu0 0
  %143 = vperm.xlu0 %142, %v73
  %v144 = vpop.permute.xlu0 %143
  %147 = vset.pattern.permute.xlu0 0
  %148 = vperm.xlu0 %147, %v74
  %v149 = vpop.permute.xlu0 %148
  %152 = vset.pattern.permute.xlu0 0
  %153 = vperm.xlu0 %152, %v75
  %v154 = vpop.permute.xlu0 %153
  %v172 = vunpack.c.l.b16 %v42
  %v173 = vunpack.c.l.b16 %v43
  %v174 = vunpack.c.l.b16 %v44
  %v175 = vunpack.c.l.b16 %v45
  %v176 = vunpack.c.l.b16 %v46
  %v177 = vunpack.c.l.b16 %v47
  %v178 = vunpack.c.l.b16 %v48
  %v179 = vunpack.c.l.b16 %v49
  %v180 = vunpack.c.l.b16 %v50
  %v181 = vunpack.c.l.b16 %v51
  %v182 = vunpack.c.l.b16 %v52
  %v183 = vunpack.c.l.b16 %v53
  %v184 = vunpack.c.l.b16 %v54
  %v185 = vunpack.c.l.b16 %v55
  %v186 = vunpack.c.l.b16 %v56
  %v187 = vunpack.c.l.b16 %v57
  %v188 = vpack.c.b16 %v173, %v172
  %v189 = vpack.c.b16 %v175, %v174
  %v190 = vpack.c.b16 %v177, %v176
  %v191 = vpack.c.b16 %v179, %v178
  %v192 = vpack.c.b16 %v181, %v180
  %v193 = vpack.c.b16 %v183, %v182
  %v194 = vpack.c.b16 %v185, %v184
  %v195 = vpack.c.b16 %v187, %v186
  %v198 = vunpack.c.l.b16 %v58
  %v199 = vunpack.c.l.b16 %v59
  %v200 = vpack.c.b16 %v199, %v198
  %vm202 = vcmask 130048
  %v204 = vsel %vm202, %v188, 0
  %v207 = vsel %vm202, %v189, 0
  %v210 = vsel %vm202, %v190, 0
  %v213 = vsel %vm202, %v191, 0
  %v216 = vsel %vm202, %v192, 0
  %v219 = vsel %vm202, %v193, 0
  %v222 = vsel %vm202, %v194, 0
  %v225 = vsel %vm202, %v195, 0
  %227 = vmatprep.subr.bf16.mxu0 0
  %228 = vmatpush1.bf16.msra.mxu0 %v200
  %229 = vmatprep.subr.bf16.mxu0 0
  %230 = vmatpush1.bf16.msra.mxu0 0
  %231 = vmatprep.subr.bf16.mxu0 0
  %232 = vmatpush1.bf16.msra.mxu0 0
  %233 = vmatprep.subr.bf16.mxu0 0
  %234 = vmatpush1.bf16.msra.mxu0 0
  %235 = vmatprep.subr.bf16.mxu0 0
  %236 = vmatpush1.bf16.msra.mxu0 0
  %237 = vmatprep.subr.bf16.mxu0 0
  %238 = vmatpush1.bf16.msra.mxu0 0
  %239 = vmatprep.subr.bf16.mxu0 0
  %240 = vmatpush1.bf16.msra.mxu0 0
  %241 = vmatprep.subr.bf16.mxu0 0
  %242 = vmatpush1.bf16.msra.mxu0 0
  %243 = vmatprep.subr.bf16.mxu0 0
  %244 = vmatpush1.bf16.msra.mxu0 0
  %245 = vmatprep.subr.bf16.mxu0 0
  %246 = vmatpush1.bf16.msra.mxu0 0
  %247 = vmatprep.subr.bf16.mxu0 0
  %248 = vmatpush1.bf16.msra.mxu0 0
  %249 = vmatprep.subr.bf16.mxu0 0
  %250 = vmatpush1.bf16.msra.mxu0 0
  %251 = vmatprep.subr.bf16.mxu0 0
  %252 = vmatpush1.bf16.msra.mxu0 0
  %253 = vmatprep.subr.bf16.mxu0 0
  %254 = vmatpush1.bf16.msra.mxu0 0
  %255 = vmatprep.subr.bf16.mxu0 0
  %256 = vmatpush1.bf16.msra.mxu0 0
  %257 = vmatprep.subr.bf16.mxu0 0
  %258 = vmatpush1.bf16.msra.mxu0 0
  %259 = vmatprep.mubr.bf16.mxu0 0
  %260 = vmatmul.mubr.bf16.gmra.mrb[0].mxu0 %v204
  %v261 = vpop.f32.mrb[0].mxu0
  %v262 = vadd.f32 %v79, %v261
  %v263 = vpop.f32.mrb[0].mxu0
  %v264 = vpop.f32.mrb[0].mxu0
  %v265 = vadd.f32 %v84, %v264
  %v266 = vpop.f32.mrb[0].mxu0
  %267 = vmatprep.mubr.bf16.mxu0 0
  %268 = vmatmul.mubr.bf16.gmra.mrb[0].mxu0 %v207
  %v269 = vpop.f32.mrb[0].mxu0
  %v270 = vadd.f32 %v89, %v269
  %v271 = vpop.f32.mrb[0].mxu0
  %v272 = vpop.f32.mrb[0].mxu0
  %v273 = vadd.f32 %v94, %v272
  %v274 = vpop.f32.mrb[0].mxu0
  %275 = vmatprep.mubr.bf16.mxu0 0
  %276 = vmatmul.mubr.bf16.gmra.mrb[0].mxu0 %v210
  %v277 = vpop.f32.mrb[0].mxu0
  %v278 = vadd.f32 %v99, %v277
  %v279 = vpop.f32.mrb[0].mxu0
  %v280 = vpop.f32.mrb[0].mxu0
  %v281 = vadd.f32 %v104, %v280
  %v282 = vpop.f32.mrb[0].mxu0
  %283 = vmatprep.mubr.bf16.mxu0 0
  %284 = vmatmul.mubr.bf16.gmra.mrb[0].mxu0 %v213
  %v285 = vpop.f32.mrb[0].mxu0
  %v286 = vadd.f32 %v109, %v285
  %v287 = vpop.f32.mrb[0].mxu0
  %v288 = vpop.f32.mrb[0].mxu0
  %v289 = vadd.f32 %v114, %v288
  %v290 = vpop.f32.mrb[0].mxu0
  %291 = vmatprep.mubr.bf16.mxu0 0
  %292 = vmatmul.mubr.bf16.gmra.mrb[0].mxu0 %v216
  %v293 = vpop.f32.mrb[0].mxu0
  %v294 = vadd.f32 %v119, %v293
  %v295 = vpop.f32.mrb[0].mxu0
  %v296 = vpop.f32.mrb[0].mxu0
  %v297 = vadd.f32 %v124, %v296
  %v298 = vpop.f32.mrb[0].mxu0
  %299 = vmatprep.mubr.bf16.mxu0 0
  %300 = vmatmul.mubr.bf16.gmra.mrb[0].mxu0 %v219
  %v301 = vpop.f32.mrb[0].mxu0
  %v302 = vadd.f32 %v129, %v301
  %v303 = vpop.f32.mrb[0].mxu0
  %v304 = vpop.f32.mrb[0].mxu0
  %v305 = vadd.f32 %v134, %v304
  %v306 = vpop.f32.mrb[0].mxu0
  %307 = vmatprep.mubr.bf16.mxu0 0
  %308 = vmatmul.mubr.bf16.gmra.mrb[0].mxu0 %v222
  %v309 = vpop.f32.mrb[0].mxu0
  %v310 = vadd.f32 %v139, %v309
  %v311 = vpop.f32.mrb[0].mxu0
  %v312 = vpop.f32.mrb[0].mxu0
  %v313 = vadd.f32 %v144, %v312
  %v314 = vpop.f32.mrb[0].mxu0
  %315 = vmatprep.mubr.bf16.mxu0 0
  %316 = vmatmul.mubr.bf16.gmra.mrb[0].mxu0 %v225
  %v317 = vpop.f32.mrb[0].mxu0
  %v318 = vadd.f32 %v149, %v317
  %v319 = vpop.f32.mrb[0].mxu0
  %v320 = vpop.f32.mrb[0].mxu0
  %v321 = vadd.f32 %v154, %v320
  %v322 = vpop.f32.mrb[0].mxu0
  %323 = vdwg.mxu0
  %v324 = vpack.c.bf16 %v265, %v262
  %v325 = vpack.c.bf16 %v273, %v270
  %v326 = vpack.c.bf16 %v281, %v278
  %v327 = vpack.c.bf16 %v289, %v286
  %v328 = vpack.c.bf16 %v297, %v294
  %v329 = vpack.c.bf16 %v305, %v302
  %v330 = vpack.c.bf16 %v313, %v310
  %v331 = vpack.c.bf16 %v321, %v318
  %v332 = vld [vmem:[%s3] sm:$0x1]
  %v333 = vld [vmem:[%s4] sm:$0x1]
  %v334 = vlaneseq
  %v335 = vshrl.u32 %v334, 7
  %v336 = vadd.s32 %v335, 8
  %v337 = vadd.s32 %v335, 16
  %v338 = vadd.s32 %v335, 24
  %v339 = vadd.s32 %v335, 32
  %v340 = vadd.s32 %v335, 40
  %v341 = vadd.s32 %v335, 48
  %v342 = vadd.s32 %v335, 56
  %v343 = vadd.s32 %v335, 64
  %v344 = vadd.s32 %v335, 72
  %v345 = vadd.s32 %v335, 80
  %v346 = vadd.s32 %v335, 88
  %v347 = vadd.s32 %v335, 96
  %v348 = vadd.s32 %v335, 104
  %v349 = vadd.s32 %v335, 112
  %v350 = vadd.s32 %v335, 120
  %v351 = vlaneseq
  %v352 = vshrl.u32 %v351, 7
  %v353 = vsub.s32 0, %v352
  %v354 = vrot.slane %v332, %v353
  %vm355 = vcmp.eq.s32.totalorder %v335, %v354
  %vm356 = vcmp.eq.s32.totalorder %v336, %v354
  %vm357 = vcmp.eq.s32.totalorder %v337, %v354
  %vm358 = vcmp.eq.s32.totalorder %v338, %v354
  %vm359 = vcmp.eq.s32.totalorder %v339, %v354
  %vm360 = vcmp.eq.s32.totalorder %v340, %v354
  %vm361 = vcmp.eq.s32.totalorder %v341, %v354
  %vm362 = vcmp.eq.s32.totalorder %v342, %v354
  %vm363 = vcmp.eq.s32.totalorder %v343, %v354
  %vm364 = vcmp.eq.s32.totalorder %v344, %v354
  %vm365 = vcmp.eq.s32.totalorder %v345, %v354
  %vm366 = vcmp.eq.s32.totalorder %v346, %v354
  %vm367 = vcmp.eq.s32.totalorder %v347, %v354
  %vm368 = vcmp.eq.s32.totalorder %v348, %v354
  %vm369 = vcmp.eq.s32.totalorder %v349, %v354
  %vm370 = vcmp.eq.s32.totalorder %v350, %v354
  %v371 = vsel %vm355, 1, 0
  %v372 = vsel %vm356, 1, 0
  %v373 = vsel %vm357, 1, 0
  %v374 = vsel %vm358, 1, 0
  %v375 = vsel %vm359, 1, 0
  %v376 = vsel %vm360, 1, 0
  %v377 = vsel %vm361, 1, 0
  %v378 = vsel %vm362, 1, 0
  %v379 = vsel %vm363, 1, 0
  %v380 = vsel %vm364, 1, 0
  %v381 = vsel %vm365, 1, 0
  %v382 = vsel %vm366, 1, 0
  %v383 = vsel %vm367, 1, 0
  %v384 = vsel %vm368, 1, 0
  %v385 = vsel %vm369, 1, 0
  %v386 = vsel %vm370, 1, 0
  %v387 = vcvt.s32.f32 %v371
  %v388 = vcvt.s32.f32 %v372
  %v389 = vcvt.s32.f32 %v373
  %v390 = vcvt.s32.f32 %v374
  %v391 = vcvt.s32.f32 %v375
  %v392 = vcvt.s32.f32 %v376
  %v393 = vcvt.s32.f32 %v377
  %v394 = vcvt.s32.f32 %v378
  %v395 = vcvt.s32.f32 %v379
  %v396 = vcvt.s32.f32 %v380
  %v397 = vcvt.s32.f32 %v381
  %v398 = vcvt.s32.f32 %v382
  %v399 = vcvt.s32.f32 %v383
  %v400 = vcvt.s32.f32 %v384
  %v401 = vcvt.s32.f32 %v385
  %v402 = vcvt.s32.f32 %v386
  %v403 = vpack.c.bf16 %v388, %v387
  %v404 = vpack.c.bf16 %v390, %v389
  %v405 = vpack.c.bf16 %v392, %v391
  %v406 = vpack.c.bf16 %v394, %v393
  %v407 = vpack.c.bf16 %v396, %v395
  %v408 = vpack.c.bf16 %v398, %v397
  %v409 = vpack.c.bf16 %v400, %v399
  %v410 = vpack.c.bf16 %v402, %v401
  %v411 = vlaneseq
  %v412 = vshrl.u32 %v411, 7
  %v413 = vsub.s32 0, %v412
  %v414 = vrot.slane %v333, %v413
  %vm415 = vcmp.eq.s32.totalorder %v335, %v414
  %vm416 = vcmp.eq.s32.totalorder %v336, %v414
  %vm417 = vcmp.eq.s32.totalorder %v337, %v414
  %vm418 = vcmp.eq.s32.totalorder %v338, %v414
  %vm419 = vcmp.eq.s32.totalorder %v339, %v414
  %vm420 = vcmp.eq.s32.totalorder %v340, %v414
  %vm421 = vcmp.eq.s32.totalorder %v341, %v414
  %vm422 = vcmp.eq.s32.totalorder %v342, %v414
  %vm423 = vcmp.eq.s32.totalorder %v343, %v414
  %vm424 = vcmp.eq.s32.totalorder %v344, %v414
  %vm425 = vcmp.eq.s32.totalorder %v345, %v414
  %vm426 = vcmp.eq.s32.totalorder %v346, %v414
  %vm427 = vcmp.eq.s32.totalorder %v347, %v414
  %vm428 = vcmp.eq.s32.totalorder %v348, %v414
  %vm429 = vcmp.eq.s32.totalorder %v349, %v414
  %vm430 = vcmp.eq.s32.totalorder %v350, %v414
  %v431 = vsel %vm415, 1, 0
  %v432 = vsel %vm416, 1, 0
  %v433 = vsel %vm417, 1, 0
  %v434 = vsel %vm418, 1, 0
  %v435 = vsel %vm419, 1, 0
  %v436 = vsel %vm420, 1, 0
  %v437 = vsel %vm421, 1, 0
  %v438 = vsel %vm422, 1, 0
  %v439 = vsel %vm423, 1, 0
  %v440 = vsel %vm424, 1, 0
  %v441 = vsel %vm425, 1, 0
  %v442 = vsel %vm426, 1, 0
  %v443 = vsel %vm427, 1, 0
  %v444 = vsel %vm428, 1, 0
  %v445 = vsel %vm429, 1, 0
  %v446 = vsel %vm430, 1, 0
  %v447 = vcvt.s32.f32 %v431
  %v448 = vcvt.s32.f32 %v432
  %v449 = vcvt.s32.f32 %v433
  %v450 = vcvt.s32.f32 %v434
  %v451 = vcvt.s32.f32 %v435
  %v452 = vcvt.s32.f32 %v436
  %v453 = vcvt.s32.f32 %v437
  %v454 = vcvt.s32.f32 %v438
  %v455 = vcvt.s32.f32 %v439
  %v456 = vcvt.s32.f32 %v440
  %v457 = vcvt.s32.f32 %v441
  %v458 = vcvt.s32.f32 %v442
  %v459 = vcvt.s32.f32 %v443
  %v460 = vcvt.s32.f32 %v444
  %v461 = vcvt.s32.f32 %v445
  %v462 = vcvt.s32.f32 %v446
  %v463 = vpack.c.bf16 %v448, %v447
  %v464 = vpack.c.bf16 %v450, %v449
  %v465 = vpack.c.bf16 %v452, %v451
  %v466 = vpack.c.bf16 %v454, %v453
  %v467 = vpack.c.bf16 %v456, %v455
  %v468 = vpack.c.bf16 %v458, %v457
  %v469 = vpack.c.bf16 %v460, %v459
  %v470 = vpack.c.bf16 %v462, %v461
  %471 = vmatprep.subr.bf16.mxu0 0
  %472 = vmatpush1.bf16.msra.mxu0 %v403
  %473 = vmatprep.subr.bf16.mxu0 0
  %474 = vmatpush1.bf16.msra.mxu0 %v404
  %475 = vmatprep.subr.bf16.mxu0 0
  %476 = vmatpush1.bf16.msra.mxu0 %v405
  %477 = vmatprep.subr.bf16.mxu0 0
  %478 = vmatpush1.bf16.msra.mxu0 %v406
  %479 = vmatprep.subr.bf16.mxu0 0
  %480 = vmatpush1.bf16.msra.mxu0 %v407
  %481 = vmatprep.subr.bf16.mxu0 0
  %482 = vmatpush1.bf16.msra.mxu0 %v408
  %483 = vmatprep.subr.bf16.mxu0 0
  %484 = vmatpush1.bf16.msra.mxu0 %v409
  %485 = vmatprep.subr.bf16.mxu0 0
  %486 = vmatpush1.bf16.msra.mxu0 %v410
  %487 = vmatprep.subr.bf16.mxu0 0
  %488 = vmatpush1.bf16.msra.mxu0 0
  %489 = vmatprep.subr.bf16.mxu0 0
  %490 = vmatpush1.bf16.msra.mxu0 0
  %491 = vmatprep.subr.bf16.mxu0 0
  %492 = vmatpush1.bf16.msra.mxu0 0
  %493 = vmatprep.subr.bf16.mxu0 0
  %494 = vmatpush1.bf16.msra.mxu0 0
  %495 = vmatprep.subr.bf16.mxu0 0
  %496 = vmatpush1.bf16.msra.mxu0 0
  %497 = vmatprep.subr.bf16.mxu0 0
  %498 = vmatpush1.bf16.msra.mxu0 0
  %499 = vmatprep.subr.bf16.mxu0 0
  %500 = vmatpush1.bf16.msra.mxu0 0
  %501 = vmatprep.subr.bf16.mxu0 0
  %502 = vmatpush1.bf16.msra.mxu0 0
  %503 = vmatprep.mubr.bf16.mxu0 0
  %504 = vmatmul.mubr.bf16.gmra.mrb[0].mxu0 %v324
  %v505 = vpop.f32.mrb[0].mxu0
  %v506 = vadd.f32 0.0, %v505
  %v507 = vpop.f32.mrb[0].mxu0
  %v508 = vpop.f32.mrb[0].mxu0
  %v509 = vadd.f32 0.0, %v508
  %v510 = vpop.f32.mrb[0].mxu0
  %511 = vmatprep.mubr.bf16.mxu0 0
  %512 = vmatmul.mubr.bf16.gmra.mrb[0].mxu0 %v325
  %v513 = vpop.f32.mrb[0].mxu0
  %v514 = vadd.f32 0.0, %v513
  %v515 = vpop.f32.mrb[0].mxu0
  %v516 = vpop.f32.mrb[0].mxu0
  %v517 = vadd.f32 0.0, %v516
  %v518 = vpop.f32.mrb[0].mxu0
  %519 = vmatprep.mubr.bf16.mxu0 0
  %520 = vmatmul.mubr.bf16.gmra.mrb[0].mxu0 %v326
  %v521 = vpop.f32.mrb[0].mxu0
  %v522 = vadd.f32 0.0, %v521
  %v523 = vpop.f32.mrb[0].mxu0
  %v524 = vpop.f32.mrb[0].mxu0
  %v525 = vadd.f32 0.0, %v524
  %v526 = vpop.f32.mrb[0].mxu0
  %527 = vmatprep.mubr.bf16.mxu0 0
  %528 = vmatmul.mubr.bf16.gmra.mrb[0].mxu0 %v327
  %v529 = vpop.f32.mrb[0].mxu0
  %v530 = vadd.f32 0.0, %v529
  %v531 = vpop.f32.mrb[0].mxu0
  %v532 = vpop.f32.mrb[0].mxu0
  %v533 = vadd.f32 0.0, %v532
  %v534 = vpop.f32.mrb[0].mxu0
  %535 = vmatprep.mubr.bf16.mxu0 0
  %536 = vmatmul.mubr.bf16.gmra.mrb[0].mxu0 %v328
  %v537 = vpop.f32.mrb[0].mxu0
  %v538 = vadd.f32 0.0, %v537
  %v539 = vpop.f32.mrb[0].mxu0
  %v540 = vpop.f32.mrb[0].mxu0
  %v541 = vadd.f32 0.0, %v540
  %v542 = vpop.f32.mrb[0].mxu0
  %543 = vmatprep.mubr.bf16.mxu0 0
  %544 = vmatmul.mubr.bf16.gmra.mrb[0].mxu0 %v329
  %v545 = vpop.f32.mrb[0].mxu0
  %v546 = vadd.f32 0.0, %v545
  %v547 = vpop.f32.mrb[0].mxu0
  %v548 = vpop.f32.mrb[0].mxu0
  %v549 = vadd.f32 0.0, %v548
  %v550 = vpop.f32.mrb[0].mxu0
  %551 = vmatprep.mubr.bf16.mxu0 0
  %552 = vmatmul.mubr.bf16.gmra.mrb[0].mxu0 %v330
  %v553 = vpop.f32.mrb[0].mxu0
  %v554 = vadd.f32 0.0, %v553
  %v555 = vpop.f32.mrb[0].mxu0
  %v556 = vpop.f32.mrb[0].mxu0
  %v557 = vadd.f32 0.0, %v556
  %v558 = vpop.f32.mrb[0].mxu0
  %559 = vmatprep.mubr.bf16.mxu0 0
  %560 = vmatmul.mubr.bf16.gmra.mrb[0].mxu0 %v331
  %v561 = vpop.f32.mrb[0].mxu0
  %v562 = vadd.f32 0.0, %v561
  %v563 = vpop.f32.mrb[0].mxu0
  %v564 = vpop.f32.mrb[0].mxu0
  %v565 = vadd.f32 0.0, %v564
  %v566 = vpop.f32.mrb[0].mxu0
  %567 = vdwg.mxu0
  %v568 = vpack.c.bf16 %v509, %v506
  %v569 = vpack.c.bf16 %v517, %v514
  %v570 = vpack.c.bf16 %v525, %v522
  %v571 = vpack.c.bf16 %v533, %v530
  %v572 = vpack.c.bf16 %v541, %v538
  %v573 = vpack.c.bf16 %v549, %v546
  %v574 = vpack.c.bf16 %v557, %v554
  %v575 = vpack.c.bf16 %v565, %v562
  %576 = vmatprep.subr.bf16.mxu0 0
  %577 = vmatpush1.bf16.msra.mxu0 %v463
  %578 = vmatprep.subr.bf16.mxu0 0
  %579 = vmatpush1.bf16.msra.mxu0 %v464
  %580 = vmatprep.subr.bf16.mxu0 0
  %581 = vmatpush1.bf16.msra.mxu0 %v465
  %582 = vmatprep.subr.bf16.mxu0 0
  %583 = vmatpush1.bf16.msra.mxu0 %v466
  %584 = vmatprep.subr.bf16.mxu0 0
  %585 = vmatpush1.bf16.msra.mxu0 %v467
  %586 = vmatprep.subr.bf16.mxu0 0
  %587 = vmatpush1.bf16.msra.mxu0 %v468
  %588 = vmatprep.subr.bf16.mxu0 0
  %589 = vmatpush1.bf16.msra.mxu0 %v469
  %590 = vmatprep.subr.bf16.mxu0 0
  %591 = vmatpush1.bf16.msra.mxu0 %v470
  %592 = vmatprep.subr.bf16.mxu0 0
  %593 = vmatpush1.bf16.msra.mxu0 0
  %594 = vmatprep.subr.bf16.mxu0 0
  %595 = vmatpush1.bf16.msra.mxu0 0
  %596 = vmatprep.subr.bf16.mxu0 0
  %597 = vmatpush1.bf16.msra.mxu0 0
  %598 = vmatprep.subr.bf16.mxu0 0
  %599 = vmatpush1.bf16.msra.mxu0 0
  %600 = vmatprep.subr.bf16.mxu0 0
  %601 = vmatpush1.bf16.msra.mxu0 0
  %602 = vmatprep.subr.bf16.mxu0 0
  %603 = vmatpush1.bf16.msra.mxu0 0
  %604 = vmatprep.subr.bf16.mxu0 0
  %605 = vmatpush1.bf16.msra.mxu0 0
  %606 = vmatprep.subr.bf16.mxu0 0
  %607 = vmatpush1.bf16.msra.mxu0 0
  %608 = vmatprep.mubr.bf16.mxu0 0
  %609 = vmatmul.mubr.bf16.gmra.mrb[0].mxu0 %v324
  %v610 = vpop.f32.mrb[0].mxu0
  %v611 = vadd.f32 0.0, %v610
  %v612 = vpop.f32.mrb[0].mxu0
  %v613 = vpop.f32.mrb[0].mxu0
  %v614 = vadd.f32 0.0, %v613
  %v615 = vpop.f32.mrb[0].mxu0
  %616 = vmatprep.mubr.bf16.mxu0 0
  %617 = vmatmul.mubr.bf16.gmra.mrb[0].mxu0 %v325
  %v618 = vpop.f32.mrb[0].mxu0
  %v619 = vadd.f32 0.0, %v618
  %v620 = vpop.f32.mrb[0].mxu0
  %v621 = vpop.f32.mrb[0].mxu0
  %v622 = vadd.f32 0.0, %v621
  %v623 = vpop.f32.mrb[0].mxu0
  %624 = vmatprep.mubr.bf16.mxu0 0
  %625 = vmatmul.mubr.bf16.gmra.mrb[0].mxu0 %v326
  %v626 = vpop.f32.mrb[0].mxu0
  %v627 = vadd.f32 0.0, %v626
  %v628 = vpop.f32.mrb[0].mxu0
  %v629 = vpop.f32.mrb[0].mxu0
  %v630 = vadd.f32 0.0, %v629
  %v631 = vpop.f32.mrb[0].mxu0
  %632 = vmatprep.mubr.bf16.mxu0 0
  %633 = vmatmul.mubr.bf16.gmra.mrb[0].mxu0 %v327
  %v634 = vpop.f32.mrb[0].mxu0
  %v635 = vadd.f32 0.0, %v634
  %v636 = vpop.f32.mrb[0].mxu0
  %v637 = vpop.f32.mrb[0].mxu0
  %v638 = vadd.f32 0.0, %v637
  %v639 = vpop.f32.mrb[0].mxu0
  %640 = vmatprep.mubr.bf16.mxu0 0
  %641 = vmatmul.mubr.bf16.gmra.mrb[0].mxu0 %v328
  %v642 = vpop.f32.mrb[0].mxu0
  %v643 = vadd.f32 0.0, %v642
  %v644 = vpop.f32.mrb[0].mxu0
  %v645 = vpop.f32.mrb[0].mxu0
  %v646 = vadd.f32 0.0, %v645
  %v647 = vpop.f32.mrb[0].mxu0
  %648 = vmatprep.mubr.bf16.mxu0 0
  %649 = vmatmul.mubr.bf16.gmra.mrb[0].mxu0 %v329
  %v650 = vpop.f32.mrb[0].mxu0
  %v651 = vadd.f32 0.0, %v650
  %v652 = vpop.f32.mrb[0].mxu0
  %v653 = vpop.f32.mrb[0].mxu0
  %v654 = vadd.f32 0.0, %v653
  %v655 = vpop.f32.mrb[0].mxu0
  %656 = vmatprep.mubr.bf16.mxu0 0
  %657 = vmatmul.mubr.bf16.gmra.mrb[0].mxu0 %v330
  %v658 = vpop.f32.mrb[0].mxu0
  %v659 = vadd.f32 0.0, %v658
  %v660 = vpop.f32.mrb[0].mxu0
  %v661 = vpop.f32.mrb[0].mxu0
  %v662 = vadd.f32 0.0, %v661
  %v663 = vpop.f32.mrb[0].mxu0
  %664 = vmatprep.mubr.bf16.mxu0 0
  %665 = vmatmul.mubr.bf16.gmra.mrb[0].mxu0 %v331
  %v666 = vpop.f32.mrb[0].mxu0
  %v667 = vadd.f32 0.0, %v666
  %v668 = vpop.f32.mrb[0].mxu0
  %v669 = vpop.f32.mrb[0].mxu0
  %v670 = vadd.f32 0.0, %v669
  %v671 = vpop.f32.mrb[0].mxu0
  %672 = vdwg.mxu0
  %v673 = vpack.c.bf16 %v614, %v611
  %v674 = vpack.c.bf16 %v622, %v619
  %v675 = vpack.c.bf16 %v630, %v627
  %v676 = vpack.c.bf16 %v638, %v635
  %v677 = vpack.c.bf16 %v646, %v643
  %v678 = vpack.c.bf16 %v654, %v651
  %v679 = vpack.c.bf16 %v662, %v659
  %v680 = vpack.c.bf16 %v670, %v667
  %v681 = vld [vmem:[%s5] sm:$0xf]
  %v682 = vld [vmem:[%s5 + $0x4] sm:$0xf]
  %v683 = vld [vmem:[%s5 + $0x8] sm:$0xf]
  %v684 = vld [vmem:[%s5 + $0xc] sm:$0xf]
  %v685 = vld [vmem:[%s5 + $0x10] sm:$0xf]
  %v686 = vld [vmem:[%s5 + $0x14] sm:$0xf]
  %v687 = vld [vmem:[%s5 + $0x18] sm:$0xf]
  %v688 = vld [vmem:[%s5 + $0x1c] sm:$0xf]
  %v689 = vld [vmem:[%s5 + $0x20] sm:$0xf]
  %v690 = vld [vmem:[%s5 + $0x24] sm:$0xf]
  %v691 = vld [vmem:[%s5 + $0x28] sm:$0xf]
  %v692 = vld [vmem:[%s5 + $0x2c] sm:$0xf]
  %v693 = vld [vmem:[%s5 + $0x30] sm:$0xf]
  %v694 = vld [vmem:[%s5 + $0x34] sm:$0xf]
  %v695 = vld [vmem:[%s5 + $0x38] sm:$0xf]
  %v696 = vld [vmem:[%s5 + $0x3c] sm:$0xf]
  %v697 = vld [vmem:[%s6] sm:$0xf]
  %v698 = vld [vmem:[%s6 + $0x4] sm:$0xf]
  %v699 = vld [vmem:[%s6 + $0x8] sm:$0xf]
  %v700 = vld [vmem:[%s6 + $0xc] sm:$0xf]
  %v701 = vld [vmem:[%s6 + $0x10] sm:$0xf]
  %v702 = vld [vmem:[%s6 + $0x14] sm:$0xf]
  %v703 = vld [vmem:[%s6 + $0x18] sm:$0xf]
  %v704 = vld [vmem:[%s6 + $0x1c] sm:$0xf]
  %v705 = vld [vmem:[%s6 + $0x20] sm:$0xf]
  %v706 = vld [vmem:[%s6 + $0x24] sm:$0xf]
  %v707 = vld [vmem:[%s6 + $0x28] sm:$0xf]
  %v708 = vld [vmem:[%s6 + $0x2c] sm:$0xf]
  %v709 = vld [vmem:[%s6 + $0x30] sm:$0xf]
  %v710 = vld [vmem:[%s6 + $0x34] sm:$0xf]
  %v711 = vld [vmem:[%s6 + $0x38] sm:$0xf]
  %v712 = vld [vmem:[%s6 + $0x3c] sm:$0xf]
  %v729 = vunpack.c.l.b16 %v697
  %v730 = vunpack.c.l.b16 %v698
  %v731 = vunpack.c.l.b16 %v699
  %v732 = vunpack.c.l.b16 %v700
  %v733 = vunpack.c.l.b16 %v701
  %v734 = vunpack.c.l.b16 %v702
  %v735 = vunpack.c.l.b16 %v703
  %v736 = vunpack.c.l.b16 %v704
  %v737 = vunpack.c.l.b16 %v705
  %v738 = vunpack.c.l.b16 %v706
  %v739 = vunpack.c.l.b16 %v707
  %v740 = vunpack.c.l.b16 %v708
  %v741 = vunpack.c.l.b16 %v709
  %v742 = vunpack.c.l.b16 %v710
  %v743 = vunpack.c.l.b16 %v711
  %v744 = vunpack.c.l.b16 %v712
  %v745 = vpack.c.b16 %v730, %v729
  %v746 = vpack.c.b16 %v732, %v731
  %v747 = vpack.c.b16 %v734, %v733
  %v748 = vpack.c.b16 %v736, %v735
  %v749 = vpack.c.b16 %v738, %v737
  %v750 = vpack.c.b16 %v740, %v739
  %v751 = vpack.c.b16 %v742, %v741
  %v752 = vpack.c.b16 %v744, %v743
  %761 = vmatprep.subr.bf16.mxu0 0
  %762 = vmatpush1.bf16.msra.mxu0 %v673
  %763 = vmatprep.subr.bf16.mxu0 0
  %764 = vmatpush1.bf16.msra.mxu0 %v674
  %765 = vmatprep.subr.bf16.mxu0 0
  %766 = vmatpush1.bf16.msra.mxu0 %v675
  %767 = vmatprep.subr.bf16.mxu0 0
  %768 = vmatpush1.bf16.msra.mxu0 %v676
  %769 = vmatprep.subr.bf16.mxu0 0
  %770 = vmatpush1.bf16.msra.mxu0 %v677
  %771 = vmatprep.subr.bf16.mxu0 0
  %772 = vmatpush1.bf16.msra.mxu0 %v678
  %773 = vmatprep.subr.bf16.mxu0 0
  %774 = vmatpush1.bf16.msra.mxu0 %v679
  %775 = vmatprep.subr.bf16.mxu0 0
  %776 = vmatpush1.bf16.msra.mxu0 %v680
  %777 = vmatprep.subr.bf16.mxu0 0
  %778 = vmatpush1.bf16.msra.mxu0 0
  %779 = vmatprep.subr.bf16.mxu0 0
  %780 = vmatpush1.bf16.msra.mxu0 0
  %781 = vmatprep.subr.bf16.mxu0 0
  %782 = vmatpush1.bf16.msra.mxu0 0
  %783 = vmatprep.subr.bf16.mxu0 0
  %784 = vmatpush1.bf16.msra.mxu0 0
  %785 = vmatprep.subr.bf16.mxu0 0
  %786 = vmatpush1.bf16.msra.mxu0 0
  %787 = vmatprep.subr.bf16.mxu0 0
  %788 = vmatpush1.bf16.msra.mxu0 0
  %789 = vmatprep.subr.bf16.mxu0 0
  %790 = vmatpush1.bf16.msra.mxu0 0
  %791 = vmatprep.subr.bf16.mxu0 0
  %792 = vmatpush1.bf16.msra.mxu0 0
  %793 = vmatprep.mubr.bf16.mxu0 0
  %794 = vmatmul.mubr.bf16.gmra.mrb[0].mxu0 %v745
  %v795 = vpop.f32.mrb[0].mxu0
  %v796 = vadd.f32 0.0, %v795
  %v797 = vpop.f32.mrb[0].mxu0
  %v798 = vpop.f32.mrb[0].mxu0
  %v799 = vadd.f32 0.0, %v798
  %v800 = vpop.f32.mrb[0].mxu0
  %801 = vmatprep.mubr.bf16.mxu0 0
  %802 = vmatmul.mubr.bf16.gmra.mrb[0].mxu0 %v746
  %v803 = vpop.f32.mrb[0].mxu0
  %v804 = vadd.f32 0.0, %v803
  %v805 = vpop.f32.mrb[0].mxu0
  %v806 = vpop.f32.mrb[0].mxu0
  %v807 = vadd.f32 0.0, %v806
  %v808 = vpop.f32.mrb[0].mxu0
  %809 = vmatprep.mubr.bf16.mxu0 0
  %810 = vmatmul.mubr.bf16.gmra.mrb[0].mxu0 %v747
  %v811 = vpop.f32.mrb[0].mxu0
  %v812 = vadd.f32 0.0, %v811
  %v813 = vpop.f32.mrb[0].mxu0
  %v814 = vpop.f32.mrb[0].mxu0
  %v815 = vadd.f32 0.0, %v814
  %v816 = vpop.f32.mrb[0].mxu0
  %817 = vmatprep.mubr.bf16.mxu0 0
  %818 = vmatmul.mubr.bf16.gmra.mrb[0].mxu0 %v748
  %v819 = vpop.f32.mrb[0].mxu0
  %v820 = vadd.f32 0.0, %v819
  %v821 = vpop.f32.mrb[0].mxu0
  %v822 = vpop.f32.mrb[0].mxu0
  %v823 = vadd.f32 0.0, %v822
  %v824 = vpop.f32.mrb[0].mxu0
  %825 = vmatprep.mubr.bf16.mxu0 0
  %826 = vmatmul.mubr.bf16.gmra.mrb[0].mxu0 %v749
  %v827 = vpop.f32.mrb[0].mxu0
  %v828 = vadd.f32 0.0, %v827
  %v829 = vpop.f32.mrb[0].mxu0
  %v830 = vpop.f32.mrb[0].mxu0
  %v831 = vadd.f32 0.0, %v830
  %v832 = vpop.f32.mrb[0].mxu0
  %833 = vmatprep.mubr.bf16.mxu0 0
  %834 = vmatmul.mubr.bf16.gmra.mrb[0].mxu0 %v750
  %v835 = vpop.f32.mrb[0].mxu0
  %v836 = vadd.f32 0.0, %v835
  %v837 = vpop.f32.mrb[0].mxu0
  %v838 = vpop.f32.mrb[0].mxu0
  %v839 = vadd.f32 0.0, %v838
  %v840 = vpop.f32.mrb[0].mxu0
  %841 = vmatprep.mubr.bf16.mxu0 0
  %842 = vmatmul.mubr.bf16.gmra.mrb[0].mxu0 %v751
  %v843 = vpop.f32.mrb[0].mxu0
  %v844 = vadd.f32 0.0, %v843
  %v845 = vpop.f32.mrb[0].mxu0
  %v846 = vpop.f32.mrb[0].mxu0
  %v847 = vadd.f32 0.0, %v846
  %v848 = vpop.f32.mrb[0].mxu0
  %849 = vmatprep.mubr.bf16.mxu0 0
  %850 = vmatmul.mubr.bf16.gmra.mrb[0].mxu0 %v752
  %v851 = vpop.f32.mrb[0].mxu0
  %v852 = vadd.f32 0.0, %v851
  %v853 = vpop.f32.mrb[0].mxu0
  %v854 = vpop.f32.mrb[0].mxu0
  %v855 = vadd.f32 0.0, %v854
  %v856 = vpop.f32.mrb[0].mxu0
  %857 = vdwg.mxu0
  %v874 = vunpack.c.l.b16 %v681
  %v875 = vunpack.c.l.b16 %v682
  %v876 = vunpack.c.l.b16 %v683
  %v877 = vunpack.c.l.b16 %v684
  %v878 = vunpack.c.l.b16 %v685
  %v879 = vunpack.c.l.b16 %v686
  %v880 = vunpack.c.l.b16 %v687
  %v881 = vunpack.c.l.b16 %v688
  %v882 = vunpack.c.l.b16 %v689
  %v883 = vunpack.c.l.b16 %v690
  %v884 = vunpack.c.l.b16 %v691
  %v885 = vunpack.c.l.b16 %v692
  %v886 = vunpack.c.l.b16 %v693
  %v887 = vunpack.c.l.b16 %v694
  %v888 = vunpack.c.l.b16 %v695
  %v889 = vunpack.c.l.b16 %v696
  %v890 = vpack.c.b16 %v875, %v874
  %v891 = vpack.c.b16 %v877, %v876
  %v892 = vpack.c.b16 %v879, %v878
  %v893 = vpack.c.b16 %v881, %v880
  %v894 = vpack.c.b16 %v883, %v882
  %v895 = vpack.c.b16 %v885, %v884
  %v896 = vpack.c.b16 %v887, %v886
  %v897 = vpack.c.b16 %v889, %v888
  %906 = vmatprep.subr.bf16.mxu0 0
  %907 = vmatpush1.bf16.msra.mxu0 %v568
  %908 = vmatprep.subr.bf16.mxu0 0
  %909 = vmatpush1.bf16.msra.mxu0 %v569
  %910 = vmatprep.subr.bf16.mxu0 0
  %911 = vmatpush1.bf16.msra.mxu0 %v570
  %912 = vmatprep.subr.bf16.mxu0 0
  %913 = vmatpush1.bf16.msra.mxu0 %v571
  %914 = vmatprep.subr.bf16.mxu0 0
  %915 = vmatpush1.bf16.msra.mxu0 %v572
  %916 = vmatprep.subr.bf16.mxu0 0
  %917 = vmatpush1.bf16.msra.mxu0 %v573
  %918 = vmatprep.subr.bf16.mxu0 0
  %919 = vmatpush1.bf16.msra.mxu0 %v574
  %920 = vmatprep.subr.bf16.mxu0 0
  %921 = vmatpush1.bf16.msra.mxu0 %v575
  %922 = vmatprep.subr.bf16.mxu0 0
  %923 = vmatpush1.bf16.msra.mxu0 0
  %924 = vmatprep.subr.bf16.mxu0 0
  %925 = vmatpush1.bf16.msra.mxu0 0
  %926 = vmatprep.subr.bf16.mxu0 0
  %927 = vmatpush1.bf16.msra.mxu0 0
  %928 = vmatprep.subr.bf16.mxu0 0
  %929 = vmatpush1.bf16.msra.mxu0 0
  %930 = vmatprep.subr.bf16.mxu0 0
  %931 = vmatpush1.bf16.msra.mxu0 0
  %932 = vmatprep.subr.bf16.mxu0 0
  %933 = vmatpush1.bf16.msra.mxu0 0
  %934 = vmatprep.subr.bf16.mxu0 0
  %935 = vmatpush1.bf16.msra.mxu0 0
  %936 = vmatprep.subr.bf16.mxu0 0
  %937 = vmatpush1.bf16.msra.mxu0 0
  %938 = vmatprep.mubr.bf16.mxu0 0
  %939 = vmatmul.mubr.bf16.gmra.mrb[0].mxu0 %v890
  %v940 = vpop.f32.mrb[0].mxu0
  %v941 = vadd.f32 %v796, %v940
  %v942 = vpop.f32.mrb[0].mxu0
  %v943 = vpop.f32.mrb[0].mxu0
  %v944 = vadd.f32 %v799, %v943
  %v945 = vpop.f32.mrb[0].mxu0
  %946 = vmatprep.mubr.bf16.mxu0 0
  %947 = vmatmul.mubr.bf16.gmra.mrb[0].mxu0 %v891
  %v948 = vpop.f32.mrb[0].mxu0
  %v949 = vadd.f32 %v804, %v948
  %v950 = vpop.f32.mrb[0].mxu0
  %v951 = vpop.f32.mrb[0].mxu0
  %v952 = vadd.f32 %v807, %v951
  %v953 = vpop.f32.mrb[0].mxu0
  %954 = vmatprep.mubr.bf16.mxu0 0
  %955 = vmatmul.mubr.bf16.gmra.mrb[0].mxu0 %v892
  %v956 = vpop.f32.mrb[0].mxu0
  %v957 = vadd.f32 %v812, %v956
  %v958 = vpop.f32.mrb[0].mxu0
  %v959 = vpop.f32.mrb[0].mxu0
  %v960 = vadd.f32 %v815, %v959
  %v961 = vpop.f32.mrb[0].mxu0
  %962 = vmatprep.mubr.bf16.mxu0 0
  %963 = vmatmul.mubr.bf16.gmra.mrb[0].mxu0 %v893
  %v964 = vpop.f32.mrb[0].mxu0
  %v965 = vadd.f32 %v820, %v964
  %v966 = vpop.f32.mrb[0].mxu0
  %v967 = vpop.f32.mrb[0].mxu0
  %v968 = vadd.f32 %v823, %v967
  %v969 = vpop.f32.mrb[0].mxu0
  %970 = vmatprep.mubr.bf16.mxu0 0
  %971 = vmatmul.mubr.bf16.gmra.mrb[0].mxu0 %v894
  %v972 = vpop.f32.mrb[0].mxu0
  %v973 = vadd.f32 %v828, %v972
  %v974 = vpop.f32.mrb[0].mxu0
  %v975 = vpop.f32.mrb[0].mxu0
  %v976 = vadd.f32 %v831, %v975
  %v977 = vpop.f32.mrb[0].mxu0
  %978 = vmatprep.mubr.bf16.mxu0 0
  %979 = vmatmul.mubr.bf16.gmra.mrb[0].mxu0 %v895
  %v980 = vpop.f32.mrb[0].mxu0
  %v981 = vadd.f32 %v836, %v980
  %v982 = vpop.f32.mrb[0].mxu0
  %v983 = vpop.f32.mrb[0].mxu0
  %v984 = vadd.f32 %v839, %v983
  %v985 = vpop.f32.mrb[0].mxu0
  %986 = vmatprep.mubr.bf16.mxu0 0
  %987 = vmatmul.mubr.bf16.gmra.mrb[0].mxu0 %v896
  %v988 = vpop.f32.mrb[0].mxu0
  %v989 = vadd.f32 %v844, %v988
  %v990 = vpop.f32.mrb[0].mxu0
  %v991 = vpop.f32.mrb[0].mxu0
  %v992 = vadd.f32 %v847, %v991
  %v993 = vpop.f32.mrb[0].mxu0
  %994 = vmatprep.mubr.bf16.mxu0 0
  %995 = vmatmul.mubr.bf16.gmra.mrb[0].mxu0 %v897
  %v996 = vpop.f32.mrb[0].mxu0
  %v997 = vadd.f32 %v852, %v996
  %v998 = vpop.f32.mrb[0].mxu0
  %v999 = vpop.f32.mrb[0].mxu0
  %v1000 = vadd.f32 %v855, %v999
  %v1001 = vpop.f32.mrb[0].mxu0
  %1002 = vdwg.mxu0
  %v1003 = vld [vmem:[%s7] sm:$0xff]
  %v1004 = vld [vmem:[%s7 + $0x8] sm:$0xff]
  %v1005 = vld [vmem:[%s7 + $0x10] sm:$0xff]
  %v1006 = vld [vmem:[%s7 + $0x18] sm:$0xff]
  %v1007 = vld [vmem:[%s7 + $0x20] sm:$0xff]
  %v1008 = vld [vmem:[%s7 + $0x28] sm:$0xff]
  %v1009 = vld [vmem:[%s7 + $0x30] sm:$0xff]
  %v1010 = vld [vmem:[%s7 + $0x38] sm:$0xff]
  %v1011 = vld [vmem:[%s7 + $0x40] sm:$0xff]
  %v1012 = vld [vmem:[%s7 + $0x48] sm:$0xff]
  %v1013 = vld [vmem:[%s7 + $0x50] sm:$0xff]
  %v1014 = vld [vmem:[%s7 + $0x58] sm:$0xff]
  %v1015 = vld [vmem:[%s7 + $0x60] sm:$0xff]
  %v1016 = vld [vmem:[%s7 + $0x68] sm:$0xff]
  %v1017 = vld [vmem:[%s7 + $0x70] sm:$0xff]
  %v1018 = vld [vmem:[%s7 + $0x78] sm:$0xff]
  %1020 = vset.pattern.permute.xlu0 0
  %1021 = vperm.xlu0 %1020, %v1003
  %v1022 = vpop.permute.xlu0 %1021
  %1025 = vset.pattern.permute.xlu0 0
  %1026 = vperm.xlu0 %1025, %v1004
  %v1027 = vpop.permute.xlu0 %1026
  %1030 = vset.pattern.permute.xlu0 0
  %1031 = vperm.xlu0 %1030, %v1005
  %v1032 = vpop.permute.xlu0 %1031
  %1035 = vset.pattern.permute.xlu0 0
  %1036 = vperm.xlu0 %1035, %v1006
  %v1037 = vpop.permute.xlu0 %1036
  %1040 = vset.pattern.permute.xlu0 0
  %1041 = vperm.xlu0 %1040, %v1007
  %v1042 = vpop.permute.xlu0 %1041
  %1045 = vset.pattern.permute.xlu0 0
  %1046 = vperm.xlu0 %1045, %v1008
  %v1047 = vpop.permute.xlu0 %1046
  %1050 = vset.pattern.permute.xlu0 0
  %1051 = vperm.xlu0 %1050, %v1009
  %v1052 = vpop.permute.xlu0 %1051
  %1055 = vset.pattern.permute.xlu0 0
  %1056 = vperm.xlu0 %1055, %v1010
  %v1057 = vpop.permute.xlu0 %1056
  %1060 = vset.pattern.permute.xlu0 0
  %1061 = vperm.xlu0 %1060, %v1011
  %v1062 = vpop.permute.xlu0 %1061
  %1065 = vset.pattern.permute.xlu0 0
  %1066 = vperm.xlu0 %1065, %v1012
  %v1067 = vpop.permute.xlu0 %1066
  %1070 = vset.pattern.permute.xlu0 0
  %1071 = vperm.xlu0 %1070, %v1013
  %v1072 = vpop.permute.xlu0 %1071
  %1075 = vset.pattern.permute.xlu0 0
  %1076 = vperm.xlu0 %1075, %v1014
  %v1077 = vpop.permute.xlu0 %1076
  %1080 = vset.pattern.permute.xlu0 0
  %1081 = vperm.xlu0 %1080, %v1015
  %v1082 = vpop.permute.xlu0 %1081
  %1085 = vset.pattern.permute.xlu0 0
  %1086 = vperm.xlu0 %1085, %v1016
  %v1087 = vpop.permute.xlu0 %1086
  %1090 = vset.pattern.permute.xlu0 0
  %1091 = vperm.xlu0 %1090, %v1017
  %v1092 = vpop.permute.xlu0 %1091
  %1095 = vset.pattern.permute.xlu0 0
  %1096 = vperm.xlu0 %1095, %v1018
  %v1097 = vpop.permute.xlu0 %1096
  %v1099 = vadd.f32 %v941, %v1022
  %v1100 = vadd.f32 %v944, %v1027
  %v1101 = vadd.f32 %v949, %v1032
  %v1102 = vadd.f32 %v952, %v1037
  %v1103 = vadd.f32 %v957, %v1042
  %v1104 = vadd.f32 %v960, %v1047
  %v1105 = vadd.f32 %v965, %v1052
  %v1106 = vadd.f32 %v968, %v1057
  %v1107 = vadd.f32 %v973, %v1062
  %v1108 = vadd.f32 %v976, %v1067
  %v1109 = vadd.f32 %v981, %v1072
  %v1110 = vadd.f32 %v984, %v1077
  %v1111 = vadd.f32 %v989, %v1082
  %v1112 = vadd.f32 %v992, %v1087
  %v1113 = vadd.f32 %v997, %v1092
  %v1114 = vadd.f32 %v1000, %v1097
  %v1115 = vmax.f32 %v1099, 0.0
  %v1116 = vmax.f32 %v1100, 0.0
  %v1117 = vmax.f32 %v1101, 0.0
  %v1118 = vmax.f32 %v1102, 0.0
  %v1119 = vmax.f32 %v1103, 0.0
  %v1120 = vmax.f32 %v1104, 0.0
  %v1121 = vmax.f32 %v1105, 0.0
  %v1122 = vmax.f32 %v1106, 0.0
  %v1123 = vmax.f32 %v1107, 0.0
  %v1124 = vmax.f32 %v1108, 0.0
  %v1125 = vmax.f32 %v1109, 0.0
  %v1126 = vmax.f32 %v1110, 0.0
  %v1127 = vmax.f32 %v1111, 0.0
  %v1128 = vmax.f32 %v1112, 0.0
  %v1129 = vmax.f32 %v1113, 0.0
  %v1130 = vmax.f32 %v1114, 0.0
  %v1131 = vpack.c.bf16 %v1116, %v1115
  %v1132 = vpack.c.bf16 %v1118, %v1117
  %v1133 = vpack.c.bf16 %v1120, %v1119
  %v1134 = vpack.c.bf16 %v1122, %v1121
  %v1135 = vpack.c.bf16 %v1124, %v1123
  %v1136 = vpack.c.bf16 %v1126, %v1125
  %v1137 = vpack.c.bf16 %v1128, %v1127
  %v1138 = vpack.c.bf16 %v1130, %v1129
  %v1139 = vld [vmem:[%s8] sm:$0xf]
  %v1140 = vld [vmem:[%s8 + $0x4] sm:$0xf]
  %v1141 = vld [vmem:[%s8 + $0x8] sm:$0xf]
  %v1142 = vld [vmem:[%s8 + $0xc] sm:$0xf]
  %v1143 = vld [vmem:[%s8 + $0x10] sm:$0xf]
  %v1144 = vld [vmem:[%s8 + $0x14] sm:$0xf]
  %v1145 = vld [vmem:[%s8 + $0x18] sm:$0xf]
  %v1146 = vld [vmem:[%s8 + $0x1c] sm:$0xf]
  %v1147 = vld [vmem:[%s8 + $0x20] sm:$0xf]
  %v1148 = vld [vmem:[%s8 + $0x24] sm:$0xf]
  %v1149 = vld [vmem:[%s8 + $0x28] sm:$0xf]
  %v1150 = vld [vmem:[%s8 + $0x2c] sm:$0xf]
  %v1151 = vld [vmem:[%s8 + $0x30] sm:$0xf]
  %v1152 = vld [vmem:[%s8 + $0x34] sm:$0xf]
  %v1153 = vld [vmem:[%s8 + $0x38] sm:$0xf]
  %v1154 = vld [vmem:[%s8 + $0x3c] sm:$0xf]
  %v1155 = vld [vmem:[%s9] sm:$0xff]
  %v1156 = vld [vmem:[%s9 + $0x8] sm:$0xff]
  %v1157 = vld [vmem:[%s9 + $0x10] sm:$0xff]
  %v1158 = vld [vmem:[%s9 + $0x18] sm:$0xff]
  %v1159 = vld [vmem:[%s9 + $0x20] sm:$0xff]
  %v1160 = vld [vmem:[%s9 + $0x28] sm:$0xff]
  %v1161 = vld [vmem:[%s9 + $0x30] sm:$0xff]
  %v1162 = vld [vmem:[%s9 + $0x38] sm:$0xff]
  %v1163 = vld [vmem:[%s9 + $0x40] sm:$0xff]
  %v1164 = vld [vmem:[%s9 + $0x48] sm:$0xff]
  %v1165 = vld [vmem:[%s9 + $0x50] sm:$0xff]
  %v1166 = vld [vmem:[%s9 + $0x58] sm:$0xff]
  %v1167 = vld [vmem:[%s9 + $0x60] sm:$0xff]
  %v1168 = vld [vmem:[%s9 + $0x68] sm:$0xff]
  %v1169 = vld [vmem:[%s9 + $0x70] sm:$0xff]
  %v1170 = vld [vmem:[%s9 + $0x78] sm:$0xff]
  %1172 = vset.pattern.permute.xlu0 0
  %1173 = vperm.xlu0 %1172, %v1155
  %v1174 = vpop.permute.xlu0 %1173
  %1177 = vset.pattern.permute.xlu0 0
  %1178 = vperm.xlu0 %1177, %v1156
  %v1179 = vpop.permute.xlu0 %1178
  %1182 = vset.pattern.permute.xlu0 0
  %1183 = vperm.xlu0 %1182, %v1157
  %v1184 = vpop.permute.xlu0 %1183
  %1187 = vset.pattern.permute.xlu0 0
  %1188 = vperm.xlu0 %1187, %v1158
  %v1189 = vpop.permute.xlu0 %1188
  %1192 = vset.pattern.permute.xlu0 0
  %1193 = vperm.xlu0 %1192, %v1159
  %v1194 = vpop.permute.xlu0 %1193
  %1197 = vset.pattern.permute.xlu0 0
  %1198 = vperm.xlu0 %1197, %v1160
  %v1199 = vpop.permute.xlu0 %1198
  %1202 = vset.pattern.permute.xlu0 0
  %1203 = vperm.xlu0 %1202, %v1161
  %v1204 = vpop.permute.xlu0 %1203
  %1207 = vset.pattern.permute.xlu0 0
  %1208 = vperm.xlu0 %1207, %v1162
  %v1209 = vpop.permute.xlu0 %1208
  %1212 = vset.pattern.permute.xlu0 0
  %1213 = vperm.xlu0 %1212, %v1163
  %v1214 = vpop.permute.xlu0 %1213
  %1217 = vset.pattern.permute.xlu0 0
  %1218 = vperm.xlu0 %1217, %v1164
  %v1219 = vpop.permute.xlu0 %1218
  %1222 = vset.pattern.permute.xlu0 0
  %1223 = vperm.xlu0 %1222, %v1165
  %v1224 = vpop.permute.xlu0 %1223
  %1227 = vset.pattern.permute.xlu0 0
  %1228 = vperm.xlu0 %1227, %v1166
  %v1229 = vpop.permute.xlu0 %1228
  %1232 = vset.pattern.permute.xlu0 0
  %1233 = vperm.xlu0 %1232, %v1167
  %v1234 = vpop.permute.xlu0 %1233
  %1237 = vset.pattern.permute.xlu0 0
  %1238 = vperm.xlu0 %1237, %v1168
  %v1239 = vpop.permute.xlu0 %1238
  %1242 = vset.pattern.permute.xlu0 0
  %1243 = vperm.xlu0 %1242, %v1169
  %v1244 = vpop.permute.xlu0 %1243
  %1247 = vset.pattern.permute.xlu0 0
  %1248 = vperm.xlu0 %1247, %v1170
  %v1249 = vpop.permute.xlu0 %1248
  %v1267 = vunpack.c.l.b16 %v1139
  %v1268 = vunpack.c.l.b16 %v1140
  %v1269 = vunpack.c.l.b16 %v1141
  %v1270 = vunpack.c.l.b16 %v1142
  %v1271 = vunpack.c.l.b16 %v1143
  %v1272 = vunpack.c.l.b16 %v1144
  %v1273 = vunpack.c.l.b16 %v1145
  %v1274 = vunpack.c.l.b16 %v1146
  %v1275 = vunpack.c.l.b16 %v1147
  %v1276 = vunpack.c.l.b16 %v1148
  %v1277 = vunpack.c.l.b16 %v1149
  %v1278 = vunpack.c.l.b16 %v1150
  %v1279 = vunpack.c.l.b16 %v1151
  %v1280 = vunpack.c.l.b16 %v1152
  %v1281 = vunpack.c.l.b16 %v1153
  %v1282 = vunpack.c.l.b16 %v1154
  %v1283 = vpack.c.b16 %v1268, %v1267
  %v1284 = vpack.c.b16 %v1270, %v1269
  %v1285 = vpack.c.b16 %v1272, %v1271
  %v1286 = vpack.c.b16 %v1274, %v1273
  %v1287 = vpack.c.b16 %v1276, %v1275
  %v1288 = vpack.c.b16 %v1278, %v1277
  %v1289 = vpack.c.b16 %v1280, %v1279
  %v1290 = vpack.c.b16 %v1282, %v1281
  %1299 = vmatprep.subr.bf16.mxu0 0
  %1300 = vmatpush1.bf16.msra.mxu0 %v1131
  %1301 = vmatprep.subr.bf16.mxu0 0
  %1302 = vmatpush1.bf16.msra.mxu0 %v1132
  %1303 = vmatprep.subr.bf16.mxu0 0
  %1304 = vmatpush1.bf16.msra.mxu0 %v1133
  %1305 = vmatprep.subr.bf16.mxu0 0
  %1306 = vmatpush1.bf16.msra.mxu0 %v1134
  %1307 = vmatprep.subr.bf16.mxu0 0
  %1308 = vmatpush1.bf16.msra.mxu0 %v1135
  %1309 = vmatprep.subr.bf16.mxu0 0
  %1310 = vmatpush1.bf16.msra.mxu0 %v1136
  %1311 = vmatprep.subr.bf16.mxu0 0
  %1312 = vmatpush1.bf16.msra.mxu0 %v1137
  %1313 = vmatprep.subr.bf16.mxu0 0
  %1314 = vmatpush1.bf16.msra.mxu0 %v1138
  %1315 = vmatprep.subr.bf16.mxu0 0
  %1316 = vmatpush1.bf16.msra.mxu0 0
  %1317 = vmatprep.subr.bf16.mxu0 0
  %1318 = vmatpush1.bf16.msra.mxu0 0
  %1319 = vmatprep.subr.bf16.mxu0 0
  %1320 = vmatpush1.bf16.msra.mxu0 0
  %1321 = vmatprep.subr.bf16.mxu0 0
  %1322 = vmatpush1.bf16.msra.mxu0 0
  %1323 = vmatprep.subr.bf16.mxu0 0
  %1324 = vmatpush1.bf16.msra.mxu0 0
  %1325 = vmatprep.subr.bf16.mxu0 0
  %1326 = vmatpush1.bf16.msra.mxu0 0
  %1327 = vmatprep.subr.bf16.mxu0 0
  %1328 = vmatpush1.bf16.msra.mxu0 0
  %1329 = vmatprep.subr.bf16.mxu0 0
  %1330 = vmatpush1.bf16.msra.mxu0 0
  %1331 = vmatprep.mubr.bf16.mxu0 0
  %1332 = vmatmul.mubr.bf16.gmra.mrb[0].mxu0 %v1283
  %v1333 = vpop.f32.mrb[0].mxu0
  %v1334 = vadd.f32 %v1174, %v1333
  %v1335 = vpop.f32.mrb[0].mxu0
  %v1336 = vpop.f32.mrb[0].mxu0
  %v1337 = vadd.f32 %v1179, %v1336
  %v1338 = vpop.f32.mrb[0].mxu0
  %1339 = vmatprep.mubr.bf16.mxu0 0
  %1340 = vmatmul.mubr.bf16.gmra.mrb[0].mxu0 %v1284
  %v1341 = vpop.f32.mrb[0].mxu0
  %v1342 = vadd.f32 %v1184, %v1341
  %v1343 = vpop.f32.mrb[0].mxu0
  %v1344 = vpop.f32.mrb[0].mxu0
  %v1345 = vadd.f32 %v1189, %v1344
  %v1346 = vpop.f32.mrb[0].mxu0
  %1347 = vmatprep.mubr.bf16.mxu0 0
  %1348 = vmatmul.mubr.bf16.gmra.mrb[0].mxu0 %v1285
  %v1349 = vpop.f32.mrb[0].mxu0
  %v1350 = vadd.f32 %v1194, %v1349
  %v1351 = vpop.f32.mrb[0].mxu0
  %v1352 = vpop.f32.mrb[0].mxu0
  %v1353 = vadd.f32 %v1199, %v1352
  %v1354 = vpop.f32.mrb[0].mxu0
  %1355 = vmatprep.mubr.bf16.mxu0 0
  %1356 = vmatmul.mubr.bf16.gmra.mrb[0].mxu0 %v1286
  %v1357 = vpop.f32.mrb[0].mxu0
  %v1358 = vadd.f32 %v1204, %v1357
  %v1359 = vpop.f32.mrb[0].mxu0
  %v1360 = vpop.f32.mrb[0].mxu0
  %v1361 = vadd.f32 %v1209, %v1360
  %v1362 = vpop.f32.mrb[0].mxu0
  %1363 = vmatprep.mubr.bf16.mxu0 0
  %1364 = vmatmul.mubr.bf16.gmra.mrb[0].mxu0 %v1287
  %v1365 = vpop.f32.mrb[0].mxu0
  %v1366 = vadd.f32 %v1214, %v1365
  %v1367 = vpop.f32.mrb[0].mxu0
  %v1368 = vpop.f32.mrb[0].mxu0
  %v1369 = vadd.f32 %v1219, %v1368
  %v1370 = vpop.f32.mrb[0].mxu0
  %1371 = vmatprep.mubr.bf16.mxu0 0
  %1372 = vmatmul.mubr.bf16.gmra.mrb[0].mxu0 %v1288
  %v1373 = vpop.f32.mrb[0].mxu0
  %v1374 = vadd.f32 %v1224, %v1373
  %v1375 = vpop.f32.mrb[0].mxu0
  %v1376 = vpop.f32.mrb[0].mxu0
  %v1377 = vadd.f32 %v1229, %v1376
  %v1378 = vpop.f32.mrb[0].mxu0
  %1379 = vmatprep.mubr.bf16.mxu0 0
  %1380 = vmatmul.mubr.bf16.gmra.mrb[0].mxu0 %v1289
  %v1381 = vpop.f32.mrb[0].mxu0
  %v1382 = vadd.f32 %v1234, %v1381
  %v1383 = vpop.f32.mrb[0].mxu0
  %v1384 = vpop.f32.mrb[0].mxu0
  %v1385 = vadd.f32 %v1239, %v1384
  %v1386 = vpop.f32.mrb[0].mxu0
  %1387 = vmatprep.mubr.bf16.mxu0 0
  %1388 = vmatmul.mubr.bf16.gmra.mrb[0].mxu0 %v1290
  %v1389 = vpop.f32.mrb[0].mxu0
  %v1390 = vadd.f32 %v1244, %v1389
  %v1391 = vpop.f32.mrb[0].mxu0
  %v1392 = vpop.f32.mrb[0].mxu0
  %v1393 = vadd.f32 %v1249, %v1392
  %v1394 = vpop.f32.mrb[0].mxu0
  %1395 = vdwg.mxu0
  %v1396 = vmax.f32 %v1334, 0.0
  %v1397 = vmax.f32 %v1337, 0.0
  %v1398 = vmax.f32 %v1342, 0.0
  %v1399 = vmax.f32 %v1345, 0.0
  %v1400 = vmax.f32 %v1350, 0.0
  %v1401 = vmax.f32 %v1353, 0.0
  %v1402 = vmax.f32 %v1358, 0.0
  %v1403 = vmax.f32 %v1361, 0.0
  %v1404 = vmax.f32 %v1366, 0.0
  %v1405 = vmax.f32 %v1369, 0.0
  %v1406 = vmax.f32 %v1374, 0.0
  %v1407 = vmax.f32 %v1377, 0.0
  %v1408 = vmax.f32 %v1382, 0.0
  %v1409 = vmax.f32 %v1385, 0.0
  %v1410 = vmax.f32 %v1390, 0.0
  %v1411 = vmax.f32 %v1393, 0.0
  %v1412 = vpack.c.bf16 %v1397, %v1396
  %v1413 = vpack.c.bf16 %v1399, %v1398
  %v1414 = vpack.c.bf16 %v1401, %v1400
  %v1415 = vpack.c.bf16 %v1403, %v1402
  %v1416 = vpack.c.bf16 %v1405, %v1404
  %v1417 = vpack.c.bf16 %v1407, %v1406
  %v1418 = vpack.c.bf16 %v1409, %v1408
  %v1419 = vpack.c.bf16 %v1411, %v1410
  %v1420 = vld [vmem:[%s10] sm:$0xf]
  %v1421 = vld [vmem:[%s11] sm:$0xff]
  %1423 = vset.pattern.permute.xlu0 0
  %1424 = vperm.xlu0 %1423, %v1421
  %v1425 = vpop.permute.xlu0 %1424
  %1427 = vmatprep.subr.bf16.mxu0 0
  %1428 = vmatpush1.bf16.msra.mxu0 %v1412
  %1429 = vmatprep.subr.bf16.mxu0 0
  %1430 = vmatpush1.bf16.msra.mxu0 %v1413
  %1431 = vmatprep.subr.bf16.mxu0 0
  %1432 = vmatpush1.bf16.msra.mxu0 %v1414
  %1433 = vmatprep.subr.bf16.mxu0 0
  %1434 = vmatpush1.bf16.msra.mxu0 %v1415
  %1435 = vmatprep.subr.bf16.mxu0 0
  %1436 = vmatpush1.bf16.msra.mxu0 %v1416
  %1437 = vmatprep.subr.bf16.mxu0 0
  %1438 = vmatpush1.bf16.msra.mxu0 %v1417
  %1439 = vmatprep.subr.bf16.mxu0 0
  %1440 = vmatpush1.bf16.msra.mxu0 %v1418
  %1441 = vmatprep.subr.bf16.mxu0 0
  %1442 = vmatpush1.bf16.msra.mxu0 %v1419
  %1443 = vmatprep.subr.bf16.mxu0 0
  %1444 = vmatpush1.bf16.msra.mxu0 0
  %1445 = vmatprep.subr.bf16.mxu0 0
  %1446 = vmatpush1.bf16.msra.mxu0 0
  %1447 = vmatprep.subr.bf16.mxu0 0
  %1448 = vmatpush1.bf16.msra.mxu0 0
  %1449 = vmatprep.subr.bf16.mxu0 0
  %1450 = vmatpush1.bf16.msra.mxu0 0
  %1451 = vmatprep.subr.bf16.mxu0 0
  %1452 = vmatpush1.bf16.msra.mxu0 0
  %1453 = vmatprep.subr.bf16.mxu0 0
  %1454 = vmatpush1.bf16.msra.mxu0 0
  %1455 = vmatprep.subr.bf16.mxu0 0
  %1456 = vmatpush1.bf16.msra.mxu0 0
  %1457 = vmatprep.subr.bf16.mxu0 0
  %1458 = vmatpush1.bf16.msra.mxu0 0
  %1459 = vmatprep.mubr.bf16.mxu0 0
  %1460 = vmatmul.mubr.bf16.gmra.mrb[0].mxu0 %v1420
  %v1461 = vpop.f32.mrb[0].mxu0
  %v1462 = vadd.f32 %v1425, %v1461
  %v1463 = vpop.f32.mrb[0].mxu0
  %v1464 = vpop.f32.mrb[0].mxu0
  %v1465 = vpop.f32.mrb[0].mxu0
  %1466 = vdwg.mxu0
  %1467 = vst [vmem:[%s12] sm:$0xff] %v1462
  // Predicated region
  $region50: #{litegt_forward.1} parent=0 // pred_check
    _
  $region51: #{litegt_forward.1} parent=0 // pred_check_branch
    %1469 = sbr.rel (0) target = $region53
  $region52: #{litegt_forward.1} parent=0 // pred_region
    _
  $region53: #{litegt_forward.1} parent=0 // pred_fallthru
    _
  // Predicated region
  $region54: #{litegt_forward.1} parent=0 // pred_check
    _
  $region55: #{litegt_forward.1} parent=0 // pred_check_branch
    %1471 = sbr.rel (0) target = $region57
  $region56: #{litegt_forward.1} parent=0 // pred_region
    _
  $region57: #{litegt_forward.1} parent=0 // pred_fallthru
    _

</llo_original>
